<compile_context>
chip_gen: v5e
topology: v5e:2x2
jax: 0.10.0
libtpu: 0.0.40
codegen_flags: <defaults>
</compile_context>

<pallas_src>
import jax
import jax.numpy as jnp
from jax import lax
from jax.experimental import pallas as pl
from jax.experimental.pallas import tpu as pltpu


def _round_up(x, m):
    return -(-x // m) * m


_UNROLL_T = 32  # fully unroll the time recurrence up to this sequence length


# ----------------------------------------------------------------------------
# Fused kernel builder.
#   refs = (x2d, [wx_l, wh_l, b_l] * num_layers, w_fc, b_fc,   # inputs
#           out,                                               # output
#           gx_scratch, seq_scratch)                           # VMEM scratch
# Weights are pre-transposed to (in, 4H) and gate-reordered to (i, f, o, g).
# ----------------------------------------------------------------------------
def _make_deeplog_kernel(T, B_pad, H, num_layers):
    H3 = 3 * H

    def lstm_cell(gates, c):
        # Gate order after wrapper-side permutation: i, f, o, g.
        sig = jax.nn.sigmoid(gates[:, :H3])      # one EUP slab (i, f, o)
        i_g = sig[:, :H]
        f_g = sig[:, H:2 * H]
        o_g = sig[:, 2 * H:H3]
        g_g = jnp.tanh(gates[:, H3:])            # one EUP slab (g)
        c_new = f_g * c + i_g * g_g
        h_new = o_g * jnp.tanh(c_new)
        return h_new, c_new

    def kernel(*refs):
        x2d_ref = refs[0]
        layer_refs = [tuple(refs[1 + 3 * l: 4 + 3 * l]) for l in range(num_layers)]
        wfc_ref, bfc_ref, out_ref, gx_sc, seq_sc = refs[1 + 3 * num_layers:]

        h = None
        for l, (wx_ref, wh_ref, b_ref) in enumerate(layer_refs):
            last_layer = (l == num_layers - 1)

            # Hoisted input projection for ALL time steps: one big MXU matmul
            # off the serial chain.  Bias already equals b_ih + b_hh.
            layer_in = x2d_ref[...] if l == 0 else seq_sc[...]  # (T*B_pad, Din_l)
            gx_sc[...] = (
                jnp.dot(layer_in, wx_ref[...], preferred_element_type=jnp.float32)
                + b_ref[...]
            )  # (T*B_pad, 4H)

            wh = wh_ref[...]  # (H, 4H), loaded once per layer, lives in vregs
            h = jnp.zeros((B_pad, H), jnp.float32)
            c = jnp.zeros((B_pad, H), jnp.float32)

            if T <= _UNROLL_T:
                # Fully unrolled: static, sublane-aligned slices (B_pad % 8 == 0)
                # and maximum LLO scheduling visibility for short sequences.
                for t in range(T):
                    row = t * B_pad
                    gates = gx_sc[row:row + B_pad, :] + jnp.dot(
                        h, wh, preferred_element_type=jnp.float32)  # (B_pad, 4H)
                    h, c = lstm_cell(gates, c)
                    if not last_layer:
                        seq_sc[row:row + B_pad, :] = h   # feed next layer
            else:
                # Rolled recurrence for long sequences: bounds code size while
                # keeping identical math; slice starts hinted sublane-aligned.
                def body(t, carry):
                    h_t, c_t = carry
                    row = pl.multiple_of(t * B_pad, 8)
                    gates = gx_sc[pl.ds(row, B_pad), :] + jnp.dot(
                        h_t, wh, preferred_element_type=jnp.float32)
                    h_t, c_t = lstm_cell(gates, c_t)
                    if not last_layer:
                        seq_sc[pl.ds(row, B_pad), :] = h_t
                    return h_t, c_t

                h, c = lax.fori_loop(0, T, body, (h, c))

        # FC head on the last hidden state of the final layer (lane-dense,
        # K padded to a multiple of 128 by the wrapper -> unmasked stores).
        out_ref[...] = (
            jnp.dot(h, wfc_ref[...], preferred_element_type=jnp.float32)
            + bfc_ref[...]
        ).astype(out_ref.dtype)

    return kernel


# ----------------------------------------------------------------------------
# DeepLog forward: features (B, T, input_size) -> (B, num_keys)
# ----------------------------------------------------------------------------
def deeplog_forward(features, params):
    B, T, Din = features.shape
    H = params["lstm"][0][1].shape[1]          # w_hh: (4H, H)
    num_layers = len(params["lstm"])
    K = params["fc_w"].shape[0]

    B_pad = _round_up(max(B, 8), 8)            # full sublane utilization
    K_pad = _round_up(max(K, 128), 128)        # lane-dense output store

    # (B, T, D) -> (T, B, D), pad batch, flatten to a 2-D (T*B_pad, D) slab.
    x = jnp.transpose(features.astype(jnp.float32), (1, 0, 2))
    if B_pad != B:
        x = jnp.pad(x, ((0, 0), (0, B_pad - B), (0, 0)))
    x2d = x.reshape(T * B_pad, Din)

    def reorder(a):  # PyTorch gate rows (i, f, g, o) -> (i, f, o, g)
        return jnp.concatenate(
            [a[:H], a[H:2 * H], a[3 * H:4 * H], a[2 * H:3 * H]], axis=0)

    inputs = [x2d]
    for (w_ih, w_hh, b_ih, b_hh) in params["lstm"]:
        wx = jnp.asarray(reorder(w_ih).T, jnp.float32)                 # (Din_l, 4H)
        wh = jnp.asarray(reorder(w_hh).T, jnp.float32)                 # (H, 4H)
        b = jnp.asarray(reorder(b_ih + b_hh)[None, :], jnp.float32)    # (1, 4H)
        inputs += [wx, wh, b]

    wfc = jnp.zeros((H, K_pad), jnp.float32).at[:, :K].set(
        jnp.asarray(params["fc_w"].T, jnp.float32))
    bfc = jnp.zeros((1, K_pad), jnp.float32).at[:, :K].set(
        jnp.asarray(params["fc_b"][None, :], jnp.float32))
    inputs += [wfc, bfc]

    kernel = _make_deeplog_kernel(T, B_pad, H, num_layers)

    # TODO(synk): for large batches on v7x, add a leading "parallel" batch grid
    #             axis so both TensorCores run disjoint batch halves.
    out_pad = pl.pallas_call(
        kernel,
        out_shape=jax.ShapeDtypeStruct((B_pad, K_pad), jnp.float32),
        in_specs=[pl.BlockSpec(memory_space=pltpu.MemorySpace.VMEM)] * len(inputs),
        out_specs=pl.BlockSpec(memory_space=pltpu.MemorySpace.VMEM),
        scratch_shapes=[
            pltpu.VMEM((T * B_pad, 4 * H), jnp.float32),   # hoisted gate proj.
            pltpu.VMEM((T * B_pad, H), jnp.float32),       # inter-layer sequence
        ],
    )(*inputs)

    return out_pad[:B, :K]


# ----------------------------------------------------------------------------
# Pure-JAX reference (PyTorch semantics: gate order i, f, g, o)
# ----------------------------------------------------------------------------
def deeplog_ref(features, params):
    x = features.astype(jnp.float32)  # (B, T, D)
    B = x.shape[0]
    for (w_ih, w_hh, b_ih, b_hh) in params["lstm"]:
        H = w_hh.shape[1]
        h = jnp.zeros((B, H), jnp.float32)
        c = jnp.zeros((B, H), jnp.float32)
        ys = []
        for t in range(x.shape[1]):
            gates = x[:, t] @ w_ih.T + h @ w_hh.T + b_ih + b_hh
            i_g = jax.nn.sigmoid(gates[:, 0 * H:1 * H])
            f_g = jax.nn.sigmoid(gates[:, 1 * H:2 * H])
            g_g = jnp.tanh(gates[:, 2 * H:3 * H])
            o_g = jax.nn.sigmoid(gates[:, 3 * H:4 * H])
            c = f_g * c + i_g * g_g
            h = o_g * jnp.tanh(c)
            ys.append(h)
        x = jnp.stack(ys, axis=1)  # (B, T, H)
    return x[:, -1, :] @ params["fc_w"].T + params["fc_b"]


# ----------------------------------------------------------------------------
# Deterministic parameter init (mirrors nn.LSTM / nn.Linear shapes)
# ----------------------------------------------------------------------------
def init_params(key, input_size, hidden_size, num_layers, num_keys):
    lstm = []
    for layer in range(num_layers):
        din = input_size if layer == 0 else hidden_size
        key, k1, k2, k3, k4 = jax.random.split(key, 5)
        scale = 1.0 / jnp.sqrt(hidden_size)
        w_ih = jax.random.uniform(k1, (4 * hidden_size, din), jnp.float32, -scale, scale)
        w_hh = jax.random.uniform(k2, (4 * hidden_size, hidden_size), jnp.float32, -scale, scale)
        b_ih = jax.random.uniform(k3, (4 * hidden_size,), jnp.float32, -scale, scale)
        b_hh = jax.random.uniform(k4, (4 * hidden_size,), jnp.float32, -scale, scale)
        lstm.append((w_ih, w_hh, b_ih, b_hh))
    key, k5, k6 = jax.random.split(key, 3)
    scale = 1.0 / jnp.sqrt(hidden_size)
    fc_w = jax.random.uniform(k5, (num_keys, hidden_size), jnp.float32, -scale, scale)
    fc_b = jax.random.uniform(k6, (num_keys,), jnp.float32, -scale, scale)
    return {"lstm": lstm, "fc_w": fc_w, "fc_b": fc_b}


if __name__ == "__main__":
    # Small shapes consistent with DeepLog(input_size, hidden_size, num_layers, num_keys)
    batch, seq = 2, 8
    input_size, hidden_size, num_layers, num_keys = 8, 32, 2, 16

    key = jax.random.PRNGKey(0)
    key, kx = jax.random.split(key)
    features = jax.random.normal(kx, (batch, seq, input_size), jnp.float32)

    params = init_params(key, input_size, hidden_size, num_layers, num_keys)

    out = deeplog_forward(features, params)
    out = jax.block_until_ready(out)

    ref = deeplog_ref(features, params)
    assert out.shape == (batch, num_keys), out.shape
    assert jnp.allclose(out, ref, atol=1e-5, rtol=1e-5), (
        float(jnp.max(jnp.abs(out - ref)))
    )

    print("KERNEL_OK")
</pallas_src>

<mosaic_0001>
module attributes {stable_mosaic.version = 11 : i64} {
  func.func @kernel(%arg0: memref<64x8xf32, #tpu.memory_space<vmem>>, %arg1: memref<8x128xf32, #tpu.memory_space<vmem>>, %arg2: memref<32x128xf32, #tpu.memory_space<vmem>>, %arg3: memref<1x128xf32, #tpu.memory_space<vmem>>, %arg4: memref<32x128xf32, #tpu.memory_space<vmem>>, %arg5: memref<32x128xf32, #tpu.memory_space<vmem>>, %arg6: memref<1x128xf32, #tpu.memory_space<vmem>>, %arg7: memref<32x128xf32, #tpu.memory_space<vmem>>, %arg8: memref<1x128xf32, #tpu.memory_space<vmem>>, %arg9: memref<8x128xf32, #tpu.memory_space<vmem>>, %arg10: memref<64x128xf32, #tpu.memory_space<vmem>>, %arg11: memref<64x32xf32, #tpu.memory_space<vmem>>) attributes {dimension_semantics = [], scalar_prefetch = 0 : i64, scratch_operands = 2 : i64, tpu.core_type = #tpu.core_type<tc>} {
    %c0 = arith.constant 0 : index
    %c0_0 = arith.constant 0 : index
    %0 = vector.load %arg0[%c0, %c0_0] : memref<64x8xf32, #tpu.memory_space<vmem>>, vector<64x8xf32>
    %c0_1 = arith.constant 0 : index
    %c0_2 = arith.constant 0 : index
    %1 = vector.load %arg1[%c0_1, %c0_2] : memref<8x128xf32, #tpu.memory_space<vmem>>, vector<8x128xf32>
    %cst = arith.constant dense<0.000000e+00> : vector<64x128xf32>
    %2 = tpu.matmul %0, %1, %cst {dimension_numbers = #tpu.dot_dimension_numbers<[1], [0], [0], [1], [0, 0, 1, 1], [], []>} : vector<64x8xf32>, vector<8x128xf32>, vector<64x128xf32> -> vector<64x128xf32>
    %c0_3 = arith.constant 0 : index
    %c0_4 = arith.constant 0 : index
    %3 = vector.load %arg3[%c0_3, %c0_4] : memref<1x128xf32, #tpu.memory_space<vmem>>, vector<1x128xf32>
    %4 = vector.broadcast %3 : vector<1x128xf32> to vector<64x128xf32>
    %5 = arith.addf %2, %4 : vector<64x128xf32>
    %c0_5 = arith.constant 0 : index
    %c0_6 = arith.constant 0 : index
    %6 = vector.load %arg10[%c0_5, %c0_6] : memref<64x128xf32, #tpu.memory_space<vmem>>, vector<64x128xf32>
    tpu.vector_store %arg10[%c0_5, %c0_6], %5 {strides = array<i32>} : memref<64x128xf32, #tpu.memory_space<vmem>>, vector<64x128xf32>,
    %c0_7 = arith.constant 0 : index
    %c0_8 = arith.constant 0 : index
    %7 = vector.load %arg2[%c0_7, %c0_8] : memref<32x128xf32, #tpu.memory_space<vmem>>, vector<32x128xf32>
    %cst_9 = arith.constant 0.000000e+00 : f32
    %8 = vector.broadcast %cst_9 : f32 to vector<8x32xf32>
    %cst_10 = arith.constant 0.000000e+00 : f32
    %9 = vector.broadcast %cst_10 : f32 to vector<8x32xf32>
    %c0_11 = arith.constant 0 : index
    %c0_12 = arith.constant 0 : index
    %10 = vector.load %arg10[%c0_11, %c0_12] : memref<64x128xf32, #tpu.memory_space<vmem>>, vector<8x128xf32>
    %cst_13 = arith.constant dense<0.000000e+00> : vector<8x128xf32>
    %11 = tpu.matmul %8, %7, %cst_13 {dimension_numbers = #tpu.dot_dimension_numbers<[1], [0], [0], [1], [0, 0, 1, 1], [], []>} : vector<8x32xf32>, vector<32x128xf32>, vector<8x128xf32> -> vector<8x128xf32>
    %12 = arith.addf %10, %11 : vector<8x128xf32>
    %13 = vector.extract_strided_slice %12 {offsets = [0, 0], sizes = [8, 96], strides = [1, 1]} : vector<8x128xf32> to vector<8x96xf32>
    %14 = arith.negf %13 : vector<8x96xf32>
    %15 = math.exp %14 : vector<8x96xf32>
    %cst_14 = arith.constant 1.000000e+00 : f32
    %16 = vector.broadcast %cst_14 : f32 to vector<8x96xf32>
    %17 = arith.addf %16, %15 : vector<8x96xf32>
    %18 = arith.divf %16, %17 : vector<8x96xf32>
    %19 = vector.extract_strided_slice %18 {offsets = [0, 0], sizes = [8, 32], strides = [1, 1]} : vector<8x96xf32> to vector<8x32xf32>
    %20 = vector.extract_strided_slice %18 {offsets = [0, 32], sizes = [8, 32], strides = [1, 1]} : vector<8x96xf32> to vector<8x32xf32>
    %21 = vector.extract_strided_slice %18 {offsets = [0, 64], sizes = [8, 32], strides = [1, 1]} : vector<8x96xf32> to vector<8x32xf32>
    %22 = vector.extract_strided_slice %12 {offsets = [0, 96], sizes = [8, 32], strides = [1, 1]} : vector<8x128xf32> to vector<8x32xf32>
    %23 = math.tanh %22 : vector<8x32xf32>
    %24 = arith.mulf %20, %9 : vector<8x32xf32>
    %25 = arith.mulf %19, %23 : vector<8x32xf32>
    %26 = arith.addf %24, %25 : vector<8x32xf32>
    %27 = math.tanh %26 : vector<8x32xf32>
    %28 = arith.mulf %21, %27 : vector<8x32xf32>
    %c0_15 = arith.constant 0 : index
    %c0_16 = arith.constant 0 : index
    %29 = vector.load %arg11[%c0_15, %c0_16] : memref<64x32xf32, #tpu.memory_space<vmem>>, vector<8x32xf32>
    tpu.vector_store %arg11[%c0_15, %c0_16], %28 {strides = array<i32>} : memref<64x32xf32, #tpu.memory_space<vmem>>, vector<8x32xf32>,
    %c8 = arith.constant 8 : index
    %c0_17 = arith.constant 0 : index
    %30 = vector.load %arg10[%c8, %c0_17] : memref<64x128xf32, #tpu.memory_space<vmem>>, vector<8x128xf32>
    %cst_18 = arith.constant dense<0.000000e+00> : vector<8x128xf32>
    %31 = tpu.matmul %28, %7, %cst_18 {dimension_numbers = #tpu.dot_dimension_numbers<[1], [0], [0], [1], [0, 0, 1, 1], [], []>} : vector<8x32xf32>, vector<32x128xf32>, vector<8x128xf32> -> vector<8x128xf32>
    %32 = arith.addf %30, %31 : vector<8x128xf32>
    %33 = vector.extract_strided_slice %32 {offsets = [0, 0], sizes = [8, 96], strides = [1, 1]} : vector<8x128xf32> to vector<8x96xf32>
    %34 = arith.negf %33 : vector<8x96xf32>
    %35 = math.exp %34 : vector<8x96xf32>
    %cst_19 = arith.constant 1.000000e+00 : f32
    %36 = vector.broadcast %cst_19 : f32 to vector<8x96xf32>
    %37 = arith.addf %36, %35 : vector<8x96xf32>
    %38 = arith.divf %36, %37 : vector<8x96xf32>
    %39 = vector.extract_strided_slice %38 {offsets = [0, 0], sizes = [8, 32], strides = [1, 1]} : vector<8x96xf32> to vector<8x32xf32>
    %40 = vector.extract_strided_slice %38 {offsets = [0, 32], sizes = [8, 32], strides = [1, 1]} : vector<8x96xf32> to vector<8x32xf32>
    %41 = vector.extract_strided_slice %38 {offsets = [0, 64], sizes = [8, 32], strides = [1, 1]} : vector<8x96xf32> to vector<8x32xf32>
    %42 = vector.extract_strided_slice %32 {offsets = [0, 96], sizes = [8, 32], strides = [1, 1]} : vector<8x128xf32> to vector<8x32xf32>
    %43 = math.tanh %42 : vector<8x32xf32>
    %44 = arith.mulf %40, %26 : vector<8x32xf32>
    %45 = arith.mulf %39, %43 : vector<8x32xf32>
    %46 = arith.addf %44, %45 : vector<8x32xf32>
    %47 = math.tanh %46 : vector<8x32xf32>
    %48 = arith.mulf %41, %47 : vector<8x32xf32>
    %c8_20 = arith.constant 8 : index
    %c0_21 = arith.constant 0 : index
    %49 = vector.load %arg11[%c8_20, %c0_21] : memref<64x32xf32, #tpu.memory_space<vmem>>, vector<8x32xf32>
    tpu.vector_store %arg11[%c8_20, %c0_21], %48 {strides = array<i32>} : memref<64x32xf32, #tpu.memory_space<vmem>>, vector<8x32xf32>,
    %c16 = arith.constant 16 : index
    %c0_22 = arith.constant 0 : index
    %50 = vector.load %arg10[%c16, %c0_22] : memref<64x128xf32, #tpu.memory_space<vmem>>, vector<8x128xf32>
    %cst_23 = arith.constant dense<0.000000e+00> : vector<8x128xf32>
    %51 = tpu.matmul %48, %7, %cst_23 {dimension_numbers = #tpu.dot_dimension_numbers<[1], [0], [0], [1], [0, 0, 1, 1], [], []>} : vector<8x32xf32>, vector<32x128xf32>, vector<8x128xf32> -> vector<8x128xf32>
    %52 = arith.addf %50, %51 : vector<8x128xf32>
    %53 = vector.extract_strided_slice %52 {offsets = [0, 0], sizes = [8, 96], strides = [1, 1]} : vector<8x128xf32> to vector<8x96xf32>
    %54 = arith.negf %53 : vector<8x96xf32>
    %55 = math.exp %54 : vector<8x96xf32>
    %cst_24 = arith.constant 1.000000e+00 : f32
    %56 = vector.broadcast %cst_24 : f32 to vector<8x96xf32>
    %57 = arith.addf %56, %55 : vector<8x96xf32>
    %58 = arith.divf %56, %57 : vector<8x96xf32>
    %59 = vector.extract_strided_slice %58 {offsets = [0, 0], sizes = [8, 32], strides = [1, 1]} : vector<8x96xf32> to vector<8x32xf32>
    %60 = vector.extract_strided_slice %58 {offsets = [0, 32], sizes = [8, 32], strides = [1, 1]} : vector<8x96xf32> to vector<8x32xf32>
    %61 = vector.extract_strided_slice %58 {offsets = [0, 64], sizes = [8, 32], strides = [1, 1]} : vector<8x96xf32> to vector<8x32xf32>
    %62 = vector.extract_strided_slice %52 {offsets = [0, 96], sizes = [8, 32], strides = [1, 1]} : vector<8x128xf32> to vector<8x32xf32>
    %63 = math.tanh %62 : vector<8x32xf32>
    %64 = arith.mulf %60, %46 : vector<8x32xf32>
    %65 = arith.mulf %59, %63 : vector<8x32xf32>
    %66 = arith.addf %64, %65 : vector<8x32xf32>
    %67 = math.tanh %66 : vector<8x32xf32>
    %68 = arith.mulf %61, %67 : vector<8x32xf32>
    %c16_25 = arith.constant 16 : index
    %c0_26 = arith.constant 0 : index
    %69 = vector.load %arg11[%c16_25, %c0_26] : memref<64x32xf32, #tpu.memory_space<vmem>>, vector<8x32xf32>
    tpu.vector_store %arg11[%c16_25, %c0_26], %68 {strides = array<i32>} : memref<64x32xf32, #tpu.memory_space<vmem>>, vector<8x32xf32>,
    %c24 = arith.constant 24 : index
    %c0_27 = arith.constant 0 : index
    %70 = vector.load %arg10[%c24, %c0_27] : memref<64x128xf32, #tpu.memory_space<vmem>>, vector<8x128xf32>
    %cst_28 = arith.constant dense<0.000000e+00> : vector<8x128xf32>
    %71 = tpu.matmul %68, %7, %cst_28 {dimension_numbers = #tpu.dot_dimension_numbers<[1], [0], [0], [1], [0, 0, 1, 1], [], []>} : vector<8x32xf32>, vector<32x128xf32>, vector<8x128xf32> -> vector<8x128xf32>
    %72 = arith.addf %70, %71 : vector<8x128xf32>
    %73 = vector.extract_strided_slice %72 {offsets = [0, 0], sizes = [8, 96], strides = [1, 1]} : vector<8x128xf32> to vector<8x96xf32>
    %74 = arith.negf %73 : vector<8x96xf32>
    %75 = math.exp %74 : vector<8x96xf32>
    %cst_29 = arith.constant 1.000000e+00 : f32
    %76 = vector.broadcast %cst_29 : f32 to vector<8x96xf32>
    %77 = arith.addf %76, %75 : vector<8x96xf32>
    %78 = arith.divf %76, %77 : vector<8x96xf32>
    %79 = vector.extract_strided_slice %78 {offsets = [0, 0], sizes = [8, 32], strides = [1, 1]} : vector<8x96xf32> to vector<8x32xf32>
    %80 = vector.extract_strided_slice %78 {offsets = [0, 32], sizes = [8, 32], strides = [1, 1]} : vector<8x96xf32> to vector<8x32xf32>
    %81 = vector.extract_strided_slice %78 {offsets = [0, 64], sizes = [8, 32], strides = [1, 1]} : vector<8x96xf32> to vector<8x32xf32>
    %82 = vector.extract_strided_slice %72 {offsets = [0, 96], sizes = [8, 32], strides = [1, 1]} : vector<8x128xf32> to vector<8x32xf32>
    %83 = math.tanh %82 : vector<8x32xf32>
    %84 = arith.mulf %80, %66 : vector<8x32xf32>
    %85 = arith.mulf %79, %83 : vector<8x32xf32>
    %86 = arith.addf %84, %85 : vector<8x32xf32>
    %87 = math.tanh %86 : vector<8x32xf32>
    %88 = arith.mulf %81, %87 : vector<8x32xf32>
    %c24_30 = arith.constant 24 : index
    %c0_31 = arith.constant 0 : index
    %89 = vector.load %arg11[%c24_30, %c0_31] : memref<64x32xf32, #tpu.memory_space<vmem>>, vector<8x32xf32>
    tpu.vector_store %arg11[%c24_30, %c0_31], %88 {strides = array<i32>} : memref<64x32xf32, #tpu.memory_space<vmem>>, vector<8x32xf32>,
    %c32 = arith.constant 32 : index
    %c0_32 = arith.constant 0 : index
    %90 = vector.load %arg10[%c32, %c0_32] : memref<64x128xf32, #tpu.memory_space<vmem>>, vector<8x128xf32>
    %cst_33 = arith.constant dense<0.000000e+00> : vector<8x128xf32>
    %91 = tpu.matmul %88, %7, %cst_33 {dimension_numbers = #tpu.dot_dimension_numbers<[1], [0], [0], [1], [0, 0, 1, 1], [], []>} : vector<8x32xf32>, vector<32x128xf32>, vector<8x128xf32> -> vector<8x128xf32>
    %92 = arith.addf %90, %91 : vector<8x128xf32>
    %93 = vector.extract_strided_slice %92 {offsets = [0, 0], sizes = [8, 96], strides = [1, 1]} : vector<8x128xf32> to vector<8x96xf32>
    %94 = arith.negf %93 : vector<8x96xf32>
    %95 = math.exp %94 : vector<8x96xf32>
    %cst_34 = arith.constant 1.000000e+00 : f32
    %96 = vector.broadcast %cst_34 : f32 to vector<8x96xf32>
    %97 = arith.addf %96, %95 : vector<8x96xf32>
    %98 = arith.divf %96, %97 : vector<8x96xf32>
    %99 = vector.extract_strided_slice %98 {offsets = [0, 0], sizes = [8, 32], strides = [1, 1]} : vector<8x96xf32> to vector<8x32xf32>
    %100 = vector.extract_strided_slice %98 {offsets = [0, 32], sizes = [8, 32], strides = [1, 1]} : vector<8x96xf32> to vector<8x32xf32>
    %101 = vector.extract_strided_slice %98 {offsets = [0, 64], sizes = [8, 32], strides = [1, 1]} : vector<8x96xf32> to vector<8x32xf32>
    %102 = vector.extract_strided_slice %92 {offsets = [0, 96], sizes = [8, 32], strides = [1, 1]} : vector<8x128xf32> to vector<8x32xf32>
    %103 = math.tanh %102 : vector<8x32xf32>
    %104 = arith.mulf %100, %86 : vector<8x32xf32>
    %105 = arith.mulf %99, %103 : vector<8x32xf32>
    %106 = arith.addf %104, %105 : vector<8x32xf32>
    %107 = math.tanh %106 : vector<8x32xf32>
    %108 = arith.mulf %101, %107 : vector<8x32xf32>
    %c32_35 = arith.constant 32 : index
    %c0_36 = arith.constant 0 : index
    %109 = vector.load %arg11[%c32_35, %c0_36] : memref<64x32xf32, #tpu.memory_space<vmem>>, vector<8x32xf32>
    tpu.vector_store %arg11[%c32_35, %c0_36], %108 {strides = array<i32>} : memref<64x32xf32, #tpu.memory_space<vmem>>, vector<8x32xf32>,
    %c40 = arith.constant 40 : index
    %c0_37 = arith.constant 0 : index
    %110 = vector.load %arg10[%c40, %c0_37] : memref<64x128xf32, #tpu.memory_space<vmem>>, vector<8x128xf32>
    %cst_38 = arith.constant dense<0.000000e+00> : vector<8x128xf32>
    %111 = tpu.matmul %108, %7, %cst_38 {dimension_numbers = #tpu.dot_dimension_numbers<[1], [0], [0], [1], [0, 0, 1, 1], [], []>} : vector<8x32xf32>, vector<32x128xf32>, vector<8x128xf32> -> vector<8x128xf32>
    %112 = arith.addf %110, %111 : vector<8x128xf32>
    %113 = vector.extract_strided_slice %112 {offsets = [0, 0], sizes = [8, 96], strides = [1, 1]} : vector<8x128xf32> to vector<8x96xf32>
    %114 = arith.negf %113 : vector<8x96xf32>
    %115 = math.exp %114 : vector<8x96xf32>
    %cst_39 = arith.constant 1.000000e+00 : f32
    %116 = vector.broadcast %cst_39 : f32 to vector<8x96xf32>
    %117 = arith.addf %116, %115 : vector<8x96xf32>
    %118 = arith.divf %116, %117 : vector<8x96xf32>
    %119 = vector.extract_strided_slice %118 {offsets = [0, 0], sizes = [8, 32], strides = [1, 1]} : vector<8x96xf32> to vector<8x32xf32>
    %120 = vector.extract_strided_slice %118 {offsets = [0, 32], sizes = [8, 32], strides = [1, 1]} : vector<8x96xf32> to vector<8x32xf32>
    %121 = vector.extract_strided_slice %118 {offsets = [0, 64], sizes = [8, 32], strides = [1, 1]} : vector<8x96xf32> to vector<8x32xf32>
    %122 = vector.extract_strided_slice %112 {offsets = [0, 96], sizes = [8, 32], strides = [1, 1]} : vector<8x128xf32> to vector<8x32xf32>
    %123 = math.tanh %122 : vector<8x32xf32>
    %124 = arith.mulf %120, %106 : vector<8x32xf32>
    %125 = arith.mulf %119, %123 : vector<8x32xf32>
    %126 = arith.addf %124, %125 : vector<8x32xf32>
    %127 = math.tanh %126 : vector<8x32xf32>
    %128 = arith.mulf %121, %127 : vector<8x32xf32>
    %c40_40 = arith.constant 40 : index
    %c0_41 = arith.constant 0 : index
    %129 = vector.load %arg11[%c40_40, %c0_41] : memref<64x32xf32, #tpu.memory_space<vmem>>, vector<8x32xf32>
    tpu.vector_store %arg11[%c40_40, %c0_41], %128 {strides = array<i32>} : memref<64x32xf32, #tpu.memory_space<vmem>>, vector<8x32xf32>,
    %c48 = arith.constant 48 : index
    %c0_42 = arith.constant 0 : index
    %130 = vector.load %arg10[%c48, %c0_42] : memref<64x128xf32, #tpu.memory_space<vmem>>, vector<8x128xf32>
    %cst_43 = arith.constant dense<0.000000e+00> : vector<8x128xf32>
    %131 = tpu.matmul %128, %7, %cst_43 {dimension_numbers = #tpu.dot_dimension_numbers<[1], [0], [0], [1], [0, 0, 1, 1], [], []>} : vector<8x32xf32>, vector<32x128xf32>, vector<8x128xf32> -> vector<8x128xf32>
    %132 = arith.addf %130, %131 : vector<8x128xf32>
    %133 = vector.extract_strided_slice %132 {offsets = [0, 0], sizes = [8, 96], strides = [1, 1]} : vector<8x128xf32> to vector<8x96xf32>
    %134 = arith.negf %133 : vector<8x96xf32>
    %135 = math.exp %134 : vector<8x96xf32>
    %cst_44 = arith.constant 1.000000e+00 : f32
    %136 = vector.broadcast %cst_44 : f32 to vector<8x96xf32>
    %137 = arith.addf %136, %135 : vector<8x96xf32>
    %138 = arith.divf %136, %137 : vector<8x96xf32>
    %139 = vector.extract_strided_slice %138 {offsets = [0, 0], sizes = [8, 32], strides = [1, 1]} : vector<8x96xf32> to vector<8x32xf32>
    %140 = vector.extract_strided_slice %138 {offsets = [0, 32], sizes = [8, 32], strides = [1, 1]} : vector<8x96xf32> to vector<8x32xf32>
    %141 = vector.extract_strided_slice %138 {offsets = [0, 64], sizes = [8, 32], strides = [1, 1]} : vector<8x96xf32> to vector<8x32xf32>
    %142 = vector.extract_strided_slice %132 {offsets = [0, 96], sizes = [8, 32], strides = [1, 1]} : vector<8x128xf32> to vector<8x32xf32>
    %143 = math.tanh %142 : vector<8x32xf32>
    %144 = arith.mulf %140, %126 : vector<8x32xf32>
    %145 = arith.mulf %139, %143 : vector<8x32xf32>
    %146 = arith.addf %144, %145 : vector<8x32xf32>
    %147 = math.tanh %146 : vector<8x32xf32>
    %148 = arith.mulf %141, %147 : vector<8x32xf32>
    %c48_45 = arith.constant 48 : index
    %c0_46 = arith.constant 0 : index
    %149 = vector.load %arg11[%c48_45, %c0_46] : memref<64x32xf32, #tpu.memory_space<vmem>>, vector<8x32xf32>
    tpu.vector_store %arg11[%c48_45, %c0_46], %148 {strides = array<i32>} : memref<64x32xf32, #tpu.memory_space<vmem>>, vector<8x32xf32>,
    %c56 = arith.constant 56 : index
    %c0_47 = arith.constant 0 : index
    %150 = vector.load %arg10[%c56, %c0_47] : memref<64x128xf32, #tpu.memory_space<vmem>>, vector<8x128xf32>
    %cst_48 = arith.constant dense<0.000000e+00> : vector<8x128xf32>
    %151 = tpu.matmul %148, %7, %cst_48 {dimension_numbers = #tpu.dot_dimension_numbers<[1], [0], [0], [1], [0, 0, 1, 1], [], []>} : vector<8x32xf32>, vector<32x128xf32>, vector<8x128xf32> -> vector<8x128xf32>
    %152 = arith.addf %150, %151 : vector<8x128xf32>
    %153 = vector.extract_strided_slice %152 {offsets = [0, 0], sizes = [8, 96], strides = [1, 1]} : vector<8x128xf32> to vector<8x96xf32>
    %154 = arith.negf %153 : vector<8x96xf32>
    %155 = math.exp %154 : vector<8x96xf32>
    %cst_49 = arith.constant 1.000000e+00 : f32
    %156 = vector.broadcast %cst_49 : f32 to vector<8x96xf32>
    %157 = arith.addf %156, %155 : vector<8x96xf32>
    %158 = arith.divf %156, %157 : vector<8x96xf32>
    %159 = vector.extract_strided_slice %158 {offsets = [0, 0], sizes = [8, 32], strides = [1, 1]} : vector<8x96xf32> to vector<8x32xf32>
    %160 = vector.extract_strided_slice %158 {offsets = [0, 32], sizes = [8, 32], strides = [1, 1]} : vector<8x96xf32> to vector<8x32xf32>
    %161 = vector.extract_strided_slice %158 {offsets = [0, 64], sizes = [8, 32], strides = [1, 1]} : vector<8x96xf32> to vector<8x32xf32>
    %162 = vector.extract_strided_slice %152 {offsets = [0, 96], sizes = [8, 32], strides = [1, 1]} : vector<8x128xf32> to vector<8x32xf32>
    %163 = math.tanh %162 : vector<8x32xf32>
    %164 = arith.mulf %160, %146 : vector<8x32xf32>
    %165 = arith.mulf %159, %163 : vector<8x32xf32>
    %166 = arith.addf %164, %165 : vector<8x32xf32>
    %167 = math.tanh %166 : vector<8x32xf32>
    %168 = arith.mulf %161, %167 : vector<8x32xf32>
    %c56_50 = arith.constant 56 : index
    %c0_51 = arith.constant 0 : index
    %169 = vector.load %arg11[%c56_50, %c0_51] : memref<64x32xf32, #tpu.memory_space<vmem>>, vector<8x32xf32>
    tpu.vector_store %arg11[%c56_50, %c0_51], %168 {strides = array<i32>} : memref<64x32xf32, #tpu.memory_space<vmem>>, vector<8x32xf32>,
    %c0_52 = arith.constant 0 : index
    %c0_53 = arith.constant 0 : index
    %170 = vector.load %arg11[%c0_52, %c0_53] : memref<64x32xf32, #tpu.memory_space<vmem>>, vector<64x32xf32>
    %c0_54 = arith.constant 0 : index
    %c0_55 = arith.constant 0 : index
    %171 = vector.load %arg4[%c0_54, %c0_55] : memref<32x128xf32, #tpu.memory_space<vmem>>, vector<32x128xf32>
    %cst_56 = arith.constant dense<0.000000e+00> : vector<64x128xf32>
    %172 = tpu.matmul %170, %171, %cst_56 {dimension_numbers = #tpu.dot_dimension_numbers<[1], [0], [0], [1], [0, 0, 1, 1], [], []>} : vector<64x32xf32>, vector<32x128xf32>, vector<64x128xf32> -> vector<64x128xf32>
    %c0_57 = arith.constant 0 : index
    %c0_58 = arith.constant 0 : index
    %173 = vector.load %arg6[%c0_57, %c0_58] : memref<1x128xf32, #tpu.memory_space<vmem>>, vector<1x128xf32>
    %174 = vector.broadcast %173 : vector<1x128xf32> to vector<64x128xf32>
    %175 = arith.addf %172, %174 : vector<64x128xf32>
    %c0_59 = arith.constant 0 : index
    %c0_60 = arith.constant 0 : index
    %176 = vector.load %arg10[%c0_59, %c0_60] : memref<64x128xf32, #tpu.memory_space<vmem>>, vector<64x128xf32>
    tpu.vector_store %arg10[%c0_59, %c0_60], %175 {strides = array<i32>} : memref<64x128xf32, #tpu.memory_space<vmem>>, vector<64x128xf32>,
    %c0_61 = arith.constant 0 : index
    %c0_62 = arith.constant 0 : index
    %177 = vector.load %arg5[%c0_61, %c0_62] : memref<32x128xf32, #tpu.memory_space<vmem>>, vector<32x128xf32>
    %cst_63 = arith.constant 0.000000e+00 : f32
    %178 = vector.broadcast %cst_63 : f32 to vector<8x32xf32>
    %cst_64 = arith.constant 0.000000e+00 : f32
    %179 = vector.broadcast %cst_64 : f32 to vector<8x32xf32>
    %c0_65 = arith.constant 0 : index
    %c0_66 = arith.constant 0 : index
    %180 = vector.load %arg10[%c0_65, %c0_66] : memref<64x128xf32, #tpu.memory_space<vmem>>, vector<8x128xf32>
    %cst_67 = arith.constant dense<0.000000e+00> : vector<8x128xf32>
    %181 = tpu.matmul %178, %177, %cst_67 {dimension_numbers = #tpu.dot_dimension_numbers<[1], [0], [0], [1], [0, 0, 1, 1], [], []>} : vector<8x32xf32>, vector<32x128xf32>, vector<8x128xf32> -> vector<8x128xf32>
    %182 = arith.addf %180, %181 : vector<8x128xf32>
    %183 = vector.extract_strided_slice %182 {offsets = [0, 0], sizes = [8, 96], strides = [1, 1]} : vector<8x128xf32> to vector<8x96xf32>
    %184 = arith.negf %183 : vector<8x96xf32>
    %185 = math.exp %184 : vector<8x96xf32>
    %cst_68 = arith.constant 1.000000e+00 : f32
    %186 = vector.broadcast %cst_68 : f32 to vector<8x96xf32>
    %187 = arith.addf %186, %185 : vector<8x96xf32>
    %188 = arith.divf %186, %187 : vector<8x96xf32>
    %189 = vector.extract_strided_slice %188 {offsets = [0, 0], sizes = [8, 32], strides = [1, 1]} : vector<8x96xf32> to vector<8x32xf32>
    %190 = vector.extract_strided_slice %188 {offsets = [0, 32], sizes = [8, 32], strides = [1, 1]} : vector<8x96xf32> to vector<8x32xf32>
    %191 = vector.extract_strided_slice %188 {offsets = [0, 64], sizes = [8, 32], strides = [1, 1]} : vector<8x96xf32> to vector<8x32xf32>
    %192 = vector.extract_strided_slice %182 {offsets = [0, 96], sizes = [8, 32], strides = [1, 1]} : vector<8x128xf32> to vector<8x32xf32>
    %193 = math.tanh %192 : vector<8x32xf32>
    %194 = arith.mulf %190, %179 : vector<8x32xf32>
    %195 = arith.mulf %189, %193 : vector<8x32xf32>
    %196 = arith.addf %194, %195 : vector<8x32xf32>
    %197 = math.tanh %196 : vector<8x32xf32>
    %198 = arith.mulf %191, %197 : vector<8x32xf32>
    %c8_69 = arith.constant 8 : index
    %c0_70 = arith.constant 0 : index
    %199 = vector.load %arg10[%c8_69, %c0_70] : memref<64x128xf32, #tpu.memory_space<vmem>>, vector<8x128xf32>
    %cst_71 = arith.constant dense<0.000000e+00> : vector<8x128xf32>
    %200 = tpu.matmul %198, %177, %cst_71 {dimension_numbers = #tpu.dot_dimension_numbers<[1], [0], [0], [1], [0, 0, 1, 1], [], []>} : vector<8x32xf32>, vector<32x128xf32>, vector<8x128xf32> -> vector<8x128xf32>
    %201 = arith.addf %199, %200 : vector<8x128xf32>
    %202 = vector.extract_strided_slice %201 {offsets = [0, 0], sizes = [8, 96], strides = [1, 1]} : vector<8x128xf32> to vector<8x96xf32>
    %203 = arith.negf %202 : vector<8x96xf32>
    %204 = math.exp %203 : vector<8x96xf32>
    %cst_72 = arith.constant 1.000000e+00 : f32
    %205 = vector.broadcast %cst_72 : f32 to vector<8x96xf32>
    %206 = arith.addf %205, %204 : vector<8x96xf32>
    %207 = arith.divf %205, %206 : vector<8x96xf32>
    %208 = vector.extract_strided_slice %207 {offsets = [0, 0], sizes = [8, 32], strides = [1, 1]} : vector<8x96xf32> to vector<8x32xf32>
    %209 = vector.extract_strided_slice %207 {offsets = [0, 32], sizes = [8, 32], strides = [1, 1]} : vector<8x96xf32> to vector<8x32xf32>
    %210 = vector.extract_strided_slice %207 {offsets = [0, 64], sizes = [8, 32], strides = [1, 1]} : vector<8x96xf32> to vector<8x32xf32>
    %211 = vector.extract_strided_slice %201 {offsets = [0, 96], sizes = [8, 32], strides = [1, 1]} : vector<8x128xf32> to vector<8x32xf32>
    %212 = math.tanh %211 : vector<8x32xf32>
    %213 = arith.mulf %209, %196 : vector<8x32xf32>
    %214 = arith.mulf %208, %212 : vector<8x32xf32>
    %215 = arith.addf %213, %214 : vector<8x32xf32>
    %216 = math.tanh %215 : vector<8x32xf32>
    %217 = arith.mulf %210, %216 : vector<8x32xf32>
    %c16_73 = arith.constant 16 : index
    %c0_74 = arith.constant 0 : index
    %218 = vector.load %arg10[%c16_73, %c0_74] : memref<64x128xf32, #tpu.memory_space<vmem>>, vector<8x128xf32>
    %cst_75 = arith.constant dense<0.000000e+00> : vector<8x128xf32>
    %219 = tpu.matmul %217, %177, %cst_75 {dimension_numbers = #tpu.dot_dimension_numbers<[1], [0], [0], [1], [0, 0, 1, 1], [], []>} : vector<8x32xf32>, vector<32x128xf32>, vector<8x128xf32> -> vector<8x128xf32>
    %220 = arith.addf %218, %219 : vector<8x128xf32>
    %221 = vector.extract_strided_slice %220 {offsets = [0, 0], sizes = [8, 96], strides = [1, 1]} : vector<8x128xf32> to vector<8x96xf32>
    %222 = arith.negf %221 : vector<8x96xf32>
    %223 = math.exp %222 : vector<8x96xf32>
    %cst_76 = arith.constant 1.000000e+00 : f32
    %224 = vector.broadcast %cst_76 : f32 to vector<8x96xf32>
    %225 = arith.addf %224, %223 : vector<8x96xf32>
    %226 = arith.divf %224, %225 : vector<8x96xf32>
    %227 = vector.extract_strided_slice %226 {offsets = [0, 0], sizes = [8, 32], strides = [1, 1]} : vector<8x96xf32> to vector<8x32xf32>
    %228 = vector.extract_strided_slice %226 {offsets = [0, 32], sizes = [8, 32], strides = [1, 1]} : vector<8x96xf32> to vector<8x32xf32>
    %229 = vector.extract_strided_slice %226 {offsets = [0, 64], sizes = [8, 32], strides = [1, 1]} : vector<8x96xf32> to vector<8x32xf32>
    %230 = vector.extract_strided_slice %220 {offsets = [0, 96], sizes = [8, 32], strides = [1, 1]} : vector<8x128xf32> to vector<8x32xf32>
    %231 = math.tanh %230 : vector<8x32xf32>
    %232 = arith.mulf %228, %215 : vector<8x32xf32>
    %233 = arith.mulf %227, %231 : vector<8x32xf32>
    %234 = arith.addf %232, %233 : vector<8x32xf32>
    %235 = math.tanh %234 : vector<8x32xf32>
    %236 = arith.mulf %229, %235 : vector<8x32xf32>
    %c24_77 = arith.constant 24 : index
    %c0_78 = arith.constant 0 : index
    %237 = vector.load %arg10[%c24_77, %c0_78] : memref<64x128xf32, #tpu.memory_space<vmem>>, vector<8x128xf32>
    %cst_79 = arith.constant dense<0.000000e+00> : vector<8x128xf32>
    %238 = tpu.matmul %236, %177, %cst_79 {dimension_numbers = #tpu.dot_dimension_numbers<[1], [0], [0], [1], [0, 0, 1, 1], [], []>} : vector<8x32xf32>, vector<32x128xf32>, vector<8x128xf32> -> vector<8x128xf32>
    %239 = arith.addf %237, %238 : vector<8x128xf32>
    %240 = vector.extract_strided_slice %239 {offsets = [0, 0], sizes = [8, 96], strides = [1, 1]} : vector<8x128xf32> to vector<8x96xf32>
    %241 = arith.negf %240 : vector<8x96xf32>
    %242 = math.exp %241 : vector<8x96xf32>
    %cst_80 = arith.constant 1.000000e+00 : f32
    %243 = vector.broadcast %cst_80 : f32 to vector<8x96xf32>
    %244 = arith.addf %243, %242 : vector<8x96xf32>
    %245 = arith.divf %243, %244 : vector<8x96xf32>
    %246 = vector.extract_strided_slice %245 {offsets = [0, 0], sizes = [8, 32], strides = [1, 1]} : vector<8x96xf32> to vector<8x32xf32>
    %247 = vector.extract_strided_slice %245 {offsets = [0, 32], sizes = [8, 32], strides = [1, 1]} : vector<8x96xf32> to vector<8x32xf32>
    %248 = vector.extract_strided_slice %245 {offsets = [0, 64], sizes = [8, 32], strides = [1, 1]} : vector<8x96xf32> to vector<8x32xf32>
    %249 = vector.extract_strided_slice %239 {offsets = [0, 96], sizes = [8, 32], strides = [1, 1]} : vector<8x128xf32> to vector<8x32xf32>
    %250 = math.tanh %249 : vector<8x32xf32>
    %251 = arith.mulf %247, %234 : vector<8x32xf32>
    %252 = arith.mulf %246, %250 : vector<8x32xf32>
    %253 = arith.addf %251, %252 : vector<8x32xf32>
    %254 = math.tanh %253 : vector<8x32xf32>
    %255 = arith.mulf %248, %254 : vector<8x32xf32>
    %c32_81 = arith.constant 32 : index
    %c0_82 = arith.constant 0 : index
    %256 = vector.load %arg10[%c32_81, %c0_82] : memref<64x128xf32, #tpu.memory_space<vmem>>, vector<8x128xf32>
    %cst_83 = arith.constant dense<0.000000e+00> : vector<8x128xf32>
    %257 = tpu.matmul %255, %177, %cst_83 {dimension_numbers = #tpu.dot_dimension_numbers<[1], [0], [0], [1], [0, 0, 1, 1], [], []>} : vector<8x32xf32>, vector<32x128xf32>, vector<8x128xf32> -> vector<8x128xf32>
    %258 = arith.addf %256, %257 : vector<8x128xf32>
    %259 = vector.extract_strided_slice %258 {offsets = [0, 0], sizes = [8, 96], strides = [1, 1]} : vector<8x128xf32> to vector<8x96xf32>
    %260 = arith.negf %259 : vector<8x96xf32>
    %261 = math.exp %260 : vector<8x96xf32>
    %cst_84 = arith.constant 1.000000e+00 : f32
    %262 = vector.broadcast %cst_84 : f32 to vector<8x96xf32>
    %263 = arith.addf %262, %261 : vector<8x96xf32>
    %264 = arith.divf %262, %263 : vector<8x96xf32>
    %265 = vector.extract_strided_slice %264 {offsets = [0, 0], sizes = [8, 32], strides = [1, 1]} : vector<8x96xf32> to vector<8x32xf32>
    %266 = vector.extract_strided_slice %264 {offsets = [0, 32], sizes = [8, 32], strides = [1, 1]} : vector<8x96xf32> to vector<8x32xf32>
    %267 = vector.extract_strided_slice %264 {offsets = [0, 64], sizes = [8, 32], strides = [1, 1]} : vector<8x96xf32> to vector<8x32xf32>
    %268 = vector.extract_strided_slice %258 {offsets = [0, 96], sizes = [8, 32], strides = [1, 1]} : vector<8x128xf32> to vector<8x32xf32>
    %269 = math.tanh %268 : vector<8x32xf32>
    %270 = arith.mulf %266, %253 : vector<8x32xf32>
    %271 = arith.mulf %265, %269 : vector<8x32xf32>
    %272 = arith.addf %270, %271 : vector<8x32xf32>
    %273 = math.tanh %272 : vector<8x32xf32>
    %274 = arith.mulf %267, %273 : vector<8x32xf32>
    %c40_85 = arith.constant 40 : index
    %c0_86 = arith.constant 0 : index
    %275 = vector.load %arg10[%c40_85, %c0_86] : memref<64x128xf32, #tpu.memory_space<vmem>>, vector<8x128xf32>
    %cst_87 = arith.constant dense<0.000000e+00> : vector<8x128xf32>
    %276 = tpu.matmul %274, %177, %cst_87 {dimension_numbers = #tpu.dot_dimension_numbers<[1], [0], [0], [1], [0, 0, 1, 1], [], []>} : vector<8x32xf32>, vector<32x128xf32>, vector<8x128xf32> -> vector<8x128xf32>
    %277 = arith.addf %275, %276 : vector<8x128xf32>
    %278 = vector.extract_strided_slice %277 {offsets = [0, 0], sizes = [8, 96], strides = [1, 1]} : vector<8x128xf32> to vector<8x96xf32>
    %279 = arith.negf %278 : vector<8x96xf32>
    %280 = math.exp %279 : vector<8x96xf32>
    %cst_88 = arith.constant 1.000000e+00 : f32
    %281 = vector.broadcast %cst_88 : f32 to vector<8x96xf32>
    %282 = arith.addf %281, %280 : vector<8x96xf32>
    %283 = arith.divf %281, %282 : vector<8x96xf32>
    %284 = vector.extract_strided_slice %283 {offsets = [0, 0], sizes = [8, 32], strides = [1, 1]} : vector<8x96xf32> to vector<8x32xf32>
    %285 = vector.extract_strided_slice %283 {offsets = [0, 32], sizes = [8, 32], strides = [1, 1]} : vector<8x96xf32> to vector<8x32xf32>
    %286 = vector.extract_strided_slice %283 {offsets = [0, 64], sizes = [8, 32], strides = [1, 1]} : vector<8x96xf32> to vector<8x32xf32>
    %287 = vector.extract_strided_slice %277 {offsets = [0, 96], sizes = [8, 32], strides = [1, 1]} : vector<8x128xf32> to vector<8x32xf32>
    %288 = math.tanh %287 : vector<8x32xf32>
    %289 = arith.mulf %285, %272 : vector<8x32xf32>
    %290 = arith.mulf %284, %288 : vector<8x32xf32>
    %291 = arith.addf %289, %290 : vector<8x32xf32>
    %292 = math.tanh %291 : vector<8x32xf32>
    %293 = arith.mulf %286, %292 : vector<8x32xf32>
    %c48_89 = arith.constant 48 : index
    %c0_90 = arith.constant 0 : index
    %294 = vector.load %arg10[%c48_89, %c0_90] : memref<64x128xf32, #tpu.memory_space<vmem>>, vector<8x128xf32>
    %cst_91 = arith.constant dense<0.000000e+00> : vector<8x128xf32>
    %295 = tpu.matmul %293, %177, %cst_91 {dimension_numbers = #tpu.dot_dimension_numbers<[1], [0], [0], [1], [0, 0, 1, 1], [], []>} : vector<8x32xf32>, vector<32x128xf32>, vector<8x128xf32> -> vector<8x128xf32>
    %296 = arith.addf %294, %295 : vector<8x128xf32>
    %297 = vector.extract_strided_slice %296 {offsets = [0, 0], sizes = [8, 96], strides = [1, 1]} : vector<8x128xf32> to vector<8x96xf32>
    %298 = arith.negf %297 : vector<8x96xf32>
    %299 = math.exp %298 : vector<8x96xf32>
    %cst_92 = arith.constant 1.000000e+00 : f32
    %300 = vector.broadcast %cst_92 : f32 to vector<8x96xf32>
    %301 = arith.addf %300, %299 : vector<8x96xf32>
    %302 = arith.divf %300, %301 : vector<8x96xf32>
    %303 = vector.extract_strided_slice %302 {offsets = [0, 0], sizes = [8, 32], strides = [1, 1]} : vector<8x96xf32> to vector<8x32xf32>
    %304 = vector.extract_strided_slice %302 {offsets = [0, 32], sizes = [8, 32], strides = [1, 1]} : vector<8x96xf32> to vector<8x32xf32>
    %305 = vector.extract_strided_slice %302 {offsets = [0, 64], sizes = [8, 32], strides = [1, 1]} : vector<8x96xf32> to vector<8x32xf32>
    %306 = vector.extract_strided_slice %296 {offsets = [0, 96], sizes = [8, 32], strides = [1, 1]} : vector<8x128xf32> to vector<8x32xf32>
    %307 = math.tanh %306 : vector<8x32xf32>
    %308 = arith.mulf %304, %291 : vector<8x32xf32>
    %309 = arith.mulf %303, %307 : vector<8x32xf32>
    %310 = arith.addf %308, %309 : vector<8x32xf32>
    %311 = math.tanh %310 : vector<8x32xf32>
    %312 = arith.mulf %305, %311 : vector<8x32xf32>
    %c56_93 = arith.constant 56 : index
    %c0_94 = arith.constant 0 : index
    %313 = vector.load %arg10[%c56_93, %c0_94] : memref<64x128xf32, #tpu.memory_space<vmem>>, vector<8x128xf32>
    %cst_95 = arith.constant dense<0.000000e+00> : vector<8x128xf32>
    %314 = tpu.matmul %312, %177, %cst_95 {dimension_numbers = #tpu.dot_dimension_numbers<[1], [0], [0], [1], [0, 0, 1, 1], [], []>} : vector<8x32xf32>, vector<32x128xf32>, vector<8x128xf32> -> vector<8x128xf32>
    %315 = arith.addf %313, %314 : vector<8x128xf32>
    %316 = vector.extract_strided_slice %315 {offsets = [0, 0], sizes = [8, 96], strides = [1, 1]} : vector<8x128xf32> to vector<8x96xf32>
    %317 = arith.negf %316 : vector<8x96xf32>
    %318 = math.exp %317 : vector<8x96xf32>
    %cst_96 = arith.constant 1.000000e+00 : f32
    %319 = vector.broadcast %cst_96 : f32 to vector<8x96xf32>
    %320 = arith.addf %319, %318 : vector<8x96xf32>
    %321 = arith.divf %319, %320 : vector<8x96xf32>
    %322 = vector.extract_strided_slice %321 {offsets = [0, 0], sizes = [8, 32], strides = [1, 1]} : vector<8x96xf32> to vector<8x32xf32>
    %323 = vector.extract_strided_slice %321 {offsets = [0, 32], sizes = [8, 32], strides = [1, 1]} : vector<8x96xf32> to vector<8x32xf32>
    %324 = vector.extract_strided_slice %321 {offsets = [0, 64], sizes = [8, 32], strides = [1, 1]} : vector<8x96xf32> to vector<8x32xf32>
    %325 = vector.extract_strided_slice %315 {offsets = [0, 96], sizes = [8, 32], strides = [1, 1]} : vector<8x128xf32> to vector<8x32xf32>
    %326 = math.tanh %325 : vector<8x32xf32>
    %327 = arith.mulf %323, %310 : vector<8x32xf32>
    %328 = arith.mulf %322, %326 : vector<8x32xf32>
    %329 = arith.addf %327, %328 : vector<8x32xf32>
    %330 = math.tanh %329 : vector<8x32xf32>
    %331 = arith.mulf %324, %330 : vector<8x32xf32>
    %c0_97 = arith.constant 0 : index
    %c0_98 = arith.constant 0 : index
    %332 = vector.load %arg7[%c0_97, %c0_98] : memref<32x128xf32, #tpu.memory_space<vmem>>, vector<32x128xf32>
    %cst_99 = arith.constant dense<0.000000e+00> : vector<8x128xf32>
    %333 = tpu.matmul %331, %332, %cst_99 {dimension_numbers = #tpu.dot_dimension_numbers<[1], [0], [0], [1], [0, 0, 1, 1], [], []>} : vector<8x32xf32>, vector<32x128xf32>, vector<8x128xf32> -> vector<8x128xf32>
    %c0_100 = arith.constant 0 : index
    %c0_101 = arith.constant 0 : index
    %334 = vector.load %arg8[%c0_100, %c0_101] : memref<1x128xf32, #tpu.memory_space<vmem>>, vector<1x128xf32>
    %335 = vector.broadcast %334 : vector<1x128xf32> to vector<8x128xf32>
    %336 = arith.addf %333, %335 : vector<8x128xf32>
    %c0_102 = arith.constant 0 : index
    %c0_103 = arith.constant 0 : index
    %337 = vector.load %arg9[%c0_102, %c0_103] : memref<8x128xf32, #tpu.memory_space<vmem>>, vector<8x128xf32>
    tpu.vector_store %arg9[%c0_102, %c0_103], %336 {strides = array<i32>} : memref<8x128xf32, #tpu.memory_space<vmem>>, vector<8x128xf32>,
    return
  }
}

</mosaic_0001>

<llo_original>
// kernel: tpu_custom_call.1
$region0: #{tpu_custom_call.1}
  #allocation0 [shape = 'u32[]', space=smem, size = 0x4, offset = 0x4, fixed_abs, tag = 'smem constant byte address 0x4 - core index']
  #allocation1 [shape = 'u32[72,128]{1,0:T(1,128)}', space=vmem, size = 0x9000, scoped, tag = 'internal scratch']
  #allocation2 [shape = 'f32[64,128]{1,0:T(8,128)}', space=vmem, size = 0x8000, scoped, tag = 'scratch operand']
  #allocation3 [shape = 'f32[64,32]{1,0:T(8,128)}', space=vmem, size = 0x8000, scoped, tag = 'scratch operand']
  %s0 = inlined_call_operand.vmem [shape: f32[64,8], index: 0, kind: input, shape index: {}]
  %s1 = inlined_call_operand.vmem [shape: f32[8,128], index: 1, kind: input, shape index: {}]
  %s2 = inlined_call_operand.vmem [shape: f32[32,128], index: 2, kind: input, shape index: {}]
  %s3 = inlined_call_operand.vmem [shape: f32[1,128], index: 3, kind: input, shape index: {}]
  %s4 = inlined_call_operand.vmem [shape: f32[32,128], index: 4, kind: input, shape index: {}]
  %s5 = inlined_call_operand.hbm [shape: f32[32,128], index: 5, kind: input, shape index: {}]
  %s6 = inlined_call_operand.vmem [shape: f32[1,128], index: 6, kind: input, shape index: {}]
  %s7 = inlined_call_operand.hbm [shape: f32[32,128], index: 7, kind: input, shape index: {}]
  %s8 = inlined_call_operand.vmem [shape: f32[1,128], index: 8, kind: input, shape index: {}]
  %s9 = inlined_call_operand.hbm [shape: f32[8,128], index: 9, kind: output, shape index: {}]
  %s10 = sld [smem:[#allocation0]]
  $region54: #{tpu_custom_call.1} parent=0
    _
  %s12 = ssub.s32 1, %s10
  %s13 = scalar_select 0, %s12, %s10
  $region1: #{tpu_custom_call.1} parent=0
    #allocation4 [shape = 'u8[16384]{0}', space=vmem, size = 0x4000, scoped, tag = 'input window, operand 5, single buffered']
    #allocation5 [shape = 's32[1]{0}', space=sflag, size = 0x4, scoped, tag = 'scoped memory for tpu_custom_call.1']
    #allocation6 [shape = 's32[1]{0}', space=sflag, size = 0x4, scoped, tag = 'scoped memory for tpu_custom_call.1']
    #allocation7 [shape = 'u8[16384]{0}', space=vmem, size = 0x4000, scoped, tag = 'input window, operand 7, single buffered']
    #allocation8 [shape = 's32[1]{0}', space=sflag, size = 0x4, scoped, tag = 'scoped memory for tpu_custom_call.1']
    #allocation9 [shape = 'u8[4096]{0}', space=vmem, size = 0x1000, scoped, tag = 'output window, operand 0, single buffered']
    %14 = vsyncpa [#allocation5], 0
    %15 = vsyncpa [#allocation8], 0
    %16 = vsyncpa [#allocation6], 0
    // Predicated region
    $region2: #{tpu_custom_call.1} parent=1 // pred_check
      _
    $region3: #{tpu_custom_call.1} parent=1 // pred_check_branch
      %18 = sbr.rel (0) target = $region5
    $region4: #{tpu_custom_call.1} parent=1 // pred_region
      _
    $region5: #{tpu_custom_call.1} parent=1 // pred_fallthru
      _
    // Predicated region
    $region6: #{tpu_custom_call.1} parent=1 // pred_check
      _
    $region7: #{tpu_custom_call.1} parent=1 // pred_check_branch
      %20 = sbr.rel (0) target = $region9
    $region8: #{tpu_custom_call.1} parent=1 // pred_region
      _
    $region9: #{tpu_custom_call.1} parent=1 // pred_fallthru
      _
    // Predicated region
    $region10: #{tpu_custom_call.1} parent=1 // pred_check
      _
    $region11: #{tpu_custom_call.1} parent=1 // pred_check_branch
      %22 = sbr.rel (0) target = $region13
    $region12: #{tpu_custom_call.1} parent=1 // pred_region
      _
    $region13: #{tpu_custom_call.1} parent=1 // pred_fallthru
      _
    // Predicated region
    $region14: #{tpu_custom_call.1} parent=1 // pred_check
      _
    $region15: #{tpu_custom_call.1} parent=1 // pred_check_branch
      %24 = sbr.rel (0) target = $region17
    $region16: #{tpu_custom_call.1} parent=1 // pred_region
      _
    $region17: #{tpu_custom_call.1} parent=1 // pred_fallthru
      _
    // Predicated region
    $region18: #{tpu_custom_call.1} parent=1 // pred_check
      _
    $region19: #{tpu_custom_call.1} parent=1 // pred_check_branch
      %26 = sbr.rel (0) target = $region21
    $region20: #{tpu_custom_call.1} parent=1 // pred_region
      _
    $region21: #{tpu_custom_call.1} parent=1 // pred_fallthru
      _
    // Predicated region
    $region22: #{tpu_custom_call.1} parent=1 // pred_check
      _
    $region23: #{tpu_custom_call.1} parent=1 // pred_check_branch
      %28 = sbr.rel (0) target = $region25
    $region24: #{tpu_custom_call.1} parent=1 // pred_region
      %30 = vsyncadd [#allocation5], 0
      %s31 = sshll.u32 %s5, 4
      %s32 = int_to_ptr.hbm [resolvable:$true] %s31
      %s33 = sshll.u32 [#allocation4], 4
      %s34 = int_to_ptr.vmem [resolvable:$true] %s33
      %39 = dma.hbm_to_vmem [thread:$0]  %s32, 512, %s34, [#allocation5], 128, 128, 8
    $region25: #{tpu_custom_call.1} parent=1 // pred_fallthru
      _
    // Predicated region
    $region26: #{tpu_custom_call.1} parent=1 // pred_check
      _
    $region27: #{tpu_custom_call.1} parent=1 // pred_check_branch
      %41 = sbr.rel (0) target = $region29
    $region28: #{tpu_custom_call.1} parent=1 // pred_region
      _
    $region29: #{tpu_custom_call.1} parent=1 // pred_fallthru
      _
    // Predicated region
    $region30: #{tpu_custom_call.1} parent=1 // pred_check
      _
    $region31: #{tpu_custom_call.1} parent=1 // pred_check_branch
      %43 = sbr.rel (0) target = $region33
    $region32: #{tpu_custom_call.1} parent=1 // pred_region
      %45 = vsyncadd [#allocation8], 0
      %s46 = sshll.u32 %s7, 4
      %s47 = int_to_ptr.hbm [resolvable:$true] %s46
      %s48 = sshll.u32 [#allocation7], 4
      %s49 = int_to_ptr.vmem [resolvable:$true] %s48
      %54 = dma.hbm_to_vmem [thread:$0]  %s47, 512, %s49, [#allocation8], 128, 128, 8
    $region33: #{tpu_custom_call.1} parent=1 // pred_fallthru
      _
    // Predicated region
    $region34: #{tpu_custom_call.1} parent=1 // pred_check
      _
    $region35: #{tpu_custom_call.1} parent=1 // pred_check_branch
      %56 = sbr.rel (0) target = $region37
    $region36: #{tpu_custom_call.1} parent=1 // pred_region
      _
    $region37: #{tpu_custom_call.1} parent=1 // pred_fallthru
      _
    // Predicated region
    $region38: #{tpu_custom_call.1} parent=1 // pred_check
      _
    $region39: #{tpu_custom_call.1} parent=1 // pred_check_branch
      %58 = sbr.rel (0) target = $region41
    $region40: #{tpu_custom_call.1} parent=1 // pred_region
      %60 = dma.done [#allocation5], 512
    $region41: #{tpu_custom_call.1} parent=1 // pred_fallthru
      _
    // Predicated region
    $region42: #{tpu_custom_call.1} parent=1 // pred_check
      _
    $region43: #{tpu_custom_call.1} parent=1 // pred_check_branch
      %62 = sbr.rel (0) target = $region45
    $region44: #{tpu_custom_call.1} parent=1 // pred_region
      %64 = dma.done [#allocation8], 512
    $region45: #{tpu_custom_call.1} parent=1 // pred_fallthru
      _
    %v65 = vld [vmem:[%s0] sm:$0xff]
    %v66 = vld [vmem:[%s0 + $0x8] sm:$0xff]
    %v67 = vld [vmem:[%s0 + $0x10] sm:$0xff]
    %v68 = vld [vmem:[%s0 + $0x18] sm:$0xff]
    %v69 = vld [vmem:[%s0 + $0x20] sm:$0xff]
    %v70 = vld [vmem:[%s0 + $0x28] sm:$0xff]
    %v71 = vld [vmem:[%s0 + $0x30] sm:$0xff]
    %v72 = vld [vmem:[%s0 + $0x38] sm:$0xff]
    %v73 = vld [vmem:[%s1] sm:$0xff]
    %v74 = vld [vmem:[%s3] sm:$0x1]
    %v76 = vperm.slane %v74, 0
    %vm78 = vcmask 64512
    %v80 = vsel %vm78, %v65, 0
    %v83 = vsel %vm78, %v66, 0
    %v86 = vsel %vm78, %v67, 0
    %v89 = vsel %vm78, %v68, 0
    %v92 = vsel %vm78, %v69, 0
    %v95 = vsel %vm78, %v70, 0
    %v98 = vsel %vm78, %v71, 0
    %v101 = vsel %vm78, %v72, 0
    %103 = vmatpush.msra.mxu0 0.0
    %104 = vmatpush.msra.mxu0 0.0
    %105 = vmatpush.msra.mxu0 0.0
    %106 = vmatpush.msra.mxu0 0.0
    %107 = vmatpush.msra.mxu0 0.0
    %108 = vmatpush.msra.mxu0 0.0
    %109 = vmatpush.msra.mxu0 0.0
    %110 = vmatpush.msra.mxu0 0.0
    %111 = vmatpush.msra.mxu0 0.0
    %112 = vmatpush.msra.mxu0 0.0
    %113 = vmatpush.msra.mxu0 0.0
    %114 = vmatpush.msra.mxu0 0.0
    %115 = vmatpush.msra.mxu0 0.0
    %116 = vmatpush.msra.mxu0 0.0
    %117 = vmatpush.msra.mxu0 0.0
    %118 = vmatpush.msra.mxu0 %v73
    %119 = vmatmul.f32.gmra.mxu0 %v80
    %v120 = vpop.f32.mrf.mxu0
    %v121 = vadd.f32 %v76, %v120
    %122 = vmatmul.f32.gmra.mxu0 %v83
    %v123 = vpop.f32.mrf.mxu0
    %v124 = vadd.f32 %v76, %v123
    %125 = vmatmul.f32.gmra.mxu0 %v86
    %v126 = vpop.f32.mrf.mxu0
    %v127 = vadd.f32 %v76, %v126
    %128 = vmatmul.f32.gmra.mxu0 %v89
    %v129 = vpop.f32.mrf.mxu0
    %v130 = vadd.f32 %v76, %v129
    %131 = vmatmul.f32.gmra.mxu0 %v92
    %v132 = vpop.f32.mrf.mxu0
    %v133 = vadd.f32 %v76, %v132
    %134 = vmatmul.f32.gmra.mxu0 %v95
    %v135 = vpop.f32.mrf.mxu0
    %v136 = vadd.f32 %v76, %v135
    %137 = vmatmul.f32.gmra.mxu0 %v98
    %v138 = vpop.f32.mrf.mxu0
    %v139 = vadd.f32 %v76, %v138
    %140 = vmatmul.f32.gmra.mxu0 %v101
    %v141 = vpop.f32.mrf.mxu0
    %v142 = vadd.f32 %v76, %v141
    %143 = vdwg.mxu0
    %144 = vst [vmem:[#allocation2] sm:$0xff] %v121
    %145 = vst [vmem:[#allocation2 + $0x8] sm:$0xff] %v124
    %146 = vst [vmem:[#allocation2 + $0x10] sm:$0xff] %v127
    %147 = vst [vmem:[#allocation2 + $0x18] sm:$0xff] %v130
    %148 = vst [vmem:[#allocation2 + $0x20] sm:$0xff] %v133
    %149 = vst [vmem:[#allocation2 + $0x28] sm:$0xff] %v136
    %150 = vst [vmem:[#allocation2 + $0x30] sm:$0xff] %v139
    %151 = vst [vmem:[#allocation2 + $0x38] sm:$0xff] %v142
    %v152 = vld [vmem:[%s2] sm:$0xff]
    %v153 = vld [vmem:[%s2 + $0x8] sm:$0xff]
    %v154 = vld [vmem:[%s2 + $0x10] sm:$0xff]
    %v155 = vld [vmem:[%s2 + $0x18] sm:$0xff]
    %v156 = vld [vmem:[#allocation2] sm:$0xff]
    %vm157 = vcmask 261120
    %v159 = vsel %vm157, 0.0, 0
    %161 = vmatpush.msra.mxu0 0.0
    %162 = vmatpush.msra.mxu0 0.0
    %163 = vmatpush.msra.mxu0 0.0
    %164 = vmatpush.msra.mxu0 0.0
    %165 = vmatpush.msra.mxu0 0.0
    %166 = vmatpush.msra.mxu0 0.0
    %167 = vmatpush.msra.mxu0 0.0
    %168 = vmatpush.msra.mxu0 0.0
    %169 = vmatpush.msra.mxu0 0.0
    %170 = vmatpush.msra.mxu0 0.0
    %171 = vmatpush.msra.mxu0 0.0
    %172 = vmatpush.msra.mxu0 0.0
    %173 = vmatpush.msra.mxu0 %v155
    %174 = vmatpush.msra.mxu0 %v154
    %175 = vmatpush.msra.mxu0 %v153
    %176 = vmatpush.msra.mxu0 %v152
    %177 = vmatmul.f32.gmra.mxu0 %v159
    %v178 = vpop.f32.mrf.mxu0
    %v179 = vadd.f32 0.0, %v178
    %180 = vdwg.mxu0
    %v181 = vadd.f32 %v156, %v179
    %v182 = vxor.u32 %v181, 2147483648
    %v183 = vmul.f32 %v182, 1.442695
    %v184 = vpow.pop %v183
    %v185 = vadd.f32 %v184, 1.0
    %v186 = vrcp.pop %v185
    %v187 = vmul.f32 %v185, %v186
    %v188 = vsub.f32 1.0, %v187
    %v189 = vmul.f32 %v186, %v188
    %v190 = vadd.f32 %v186, %v189
    %vm191 = vweird.f32 %v185
    %vm192 = vweird.f32 %v186
    %vm193 = vmor %vm191, %vm192
    %v194 = vsel %vm193, %v186, %v190
    %v195 = vand.u32 2147483647, %v185
    %vm196 = vcmp.eq.f32.partialorder %v195, 8.507059e+37
    %v197 = vand.u32 %v185, 2147483648
    %v198 = vor.u32 1.1754944e-38, %v197
    %v199 = vsel %vm196, %v198, %v194
    %v200 = vmul.f32 1.0, %v199
    %v201 = vtanh.pop %v181
    %v202 = vmul.f32 %v200, 0.0
    %204 = vrot.lane.b32.xlu0 %v201, 32
    %v205 = vpop.permute.xlu0 %204
    %v207 = vmul.f32 %v200, %v205
    %209 = vrot.lane.b32.xlu0 %v207, 32
    %v210 = vpop.permute.xlu0 %209
    %v212 = vadd.f32 %v202, %v210
    %v213 = vtanh.pop %v212
    %215 = vrot.lane.b32.xlu0 %v213, 32
    %v216 = vpop.permute.xlu0 %215
    %v218 = vmul.f32 %v200, %v216
    %220 = vrot.lane.b32.xlu0 %v218, 64
    %v221 = vpop.permute.xlu0 %220
    %223 = vst.msk [vmem:[#allocation3] sm:$0xff] %vm157, %v221
    %v224 = vld [vmem:[#allocation2 + $0x8] sm:$0xff]
    %v225 = vsel %vm157, %v221, 0
    %227 = vmatpush.msra.mxu0 0.0
    %228 = vmatpush.msra.mxu0 0.0
    %229 = vmatpush.msra.mxu0 0.0
    %230 = vmatpush.msra.mxu0 0.0
    %231 = vmatpush.msra.mxu0 0.0
    %232 = vmatpush.msra.mxu0 0.0
    %233 = vmatpush.msra.mxu0 0.0
    %234 = vmatpush.msra.mxu0 0.0
    %235 = vmatpush.msra.mxu0 0.0
    %236 = vmatpush.msra.mxu0 0.0
    %237 = vmatpush.msra.mxu0 0.0
    %238 = vmatpush.msra.mxu0 0.0
    %239 = vmatpush.msra.mxu0 %v155
    %240 = vmatpush.msra.mxu0 %v154
    %241 = vmatpush.msra.mxu0 %v153
    %242 = vmatpush.msra.mxu0 %v152
    %243 = vmatmul.f32.gmra.mxu0 %v225
    %v244 = vpop.f32.mrf.mxu0
    %v245 = vadd.f32 0.0, %v244
    %246 = vdwg.mxu0
    %v247 = vadd.f32 %v224, %v245
    %v248 = vxor.u32 %v247, 2147483648
    %v249 = vmul.f32 %v248, 1.442695
    %v250 = vpow.pop %v249
    %v251 = vadd.f32 %v250, 1.0
    %v252 = vrcp.pop %v251
    %v253 = vmul.f32 %v251, %v252
    %v254 = vsub.f32 1.0, %v253
    %v255 = vmul.f32 %v252, %v254
    %v256 = vadd.f32 %v252, %v255
    %vm257 = vweird.f32 %v251
    %vm258 = vweird.f32 %v252
    %vm259 = vmor %vm257, %vm258
    %v260 = vsel %vm259, %v252, %v256
    %v261 = vand.u32 2147483647, %v251
    %vm262 = vcmp.eq.f32.partialorder %v261, 8.507059e+37
    %v263 = vand.u32 %v251, 2147483648
    %v264 = vor.u32 1.1754944e-38, %v263
    %v265 = vsel %vm262, %v264, %v260
    %v266 = vmul.f32 1.0, %v265
    %v267 = vtanh.pop %v247
    %v268 = vmul.f32 %v266, %v212
    %270 = vrot.lane.b32.xlu0 %v267, 32
    %v271 = vpop.permute.xlu0 %270
    %v273 = vmul.f32 %v266, %v271
    %275 = vrot.lane.b32.xlu0 %v273, 32
    %v276 = vpop.permute.xlu0 %275
    %v278 = vadd.f32 %v268, %v276
    %v279 = vtanh.pop %v278
    %281 = vrot.lane.b32.xlu0 %v279, 32
    %v282 = vpop.permute.xlu0 %281
    %v284 = vmul.f32 %v266, %v282
    %286 = vrot.lane.b32.xlu0 %v284, 64
    %v287 = vpop.permute.xlu0 %286
    %289 = vst.msk [vmem:[#allocation3 + $0x8] sm:$0xff] %vm157, %v287
    %v290 = vld [vmem:[#allocation2 + $0x10] sm:$0xff]
    %v291 = vsel %vm157, %v287, 0
    %293 = vmatpush.msra.mxu0 0.0
    %294 = vmatpush.msra.mxu0 0.0
    %295 = vmatpush.msra.mxu0 0.0
    %296 = vmatpush.msra.mxu0 0.0
    %297 = vmatpush.msra.mxu0 0.0
    %298 = vmatpush.msra.mxu0 0.0
    %299 = vmatpush.msra.mxu0 0.0
    %300 = vmatpush.msra.mxu0 0.0
    %301 = vmatpush.msra.mxu0 0.0
    %302 = vmatpush.msra.mxu0 0.0
    %303 = vmatpush.msra.mxu0 0.0
    %304 = vmatpush.msra.mxu0 0.0
    %305 = vmatpush.msra.mxu0 %v155
    %306 = vmatpush.msra.mxu0 %v154
    %307 = vmatpush.msra.mxu0 %v153
    %308 = vmatpush.msra.mxu0 %v152
    %309 = vmatmul.f32.gmra.mxu0 %v291
    %v310 = vpop.f32.mrf.mxu0
    %v311 = vadd.f32 0.0, %v310
    %312 = vdwg.mxu0
    %v313 = vadd.f32 %v290, %v311
    %v314 = vxor.u32 %v313, 2147483648
    %v315 = vmul.f32 %v314, 1.442695
    %v316 = vpow.pop %v315
    %v317 = vadd.f32 %v316, 1.0
    %v318 = vrcp.pop %v317
    %v319 = vmul.f32 %v317, %v318
    %v320 = vsub.f32 1.0, %v319
    %v321 = vmul.f32 %v318, %v320
    %v322 = vadd.f32 %v318, %v321
    %vm323 = vweird.f32 %v317
    %vm324 = vweird.f32 %v318
    %vm325 = vmor %vm323, %vm324
    %v326 = vsel %vm325, %v318, %v322
    %v327 = vand.u32 2147483647, %v317
    %vm328 = vcmp.eq.f32.partialorder %v327, 8.507059e+37
    %v329 = vand.u32 %v317, 2147483648
    %v330 = vor.u32 1.1754944e-38, %v329
    %v331 = vsel %vm328, %v330, %v326
    %v332 = vmul.f32 1.0, %v331
    %v333 = vtanh.pop %v313
    %v334 = vmul.f32 %v332, %v278
    %336 = vrot.lane.b32.xlu0 %v333, 32
    %v337 = vpop.permute.xlu0 %336
    %v339 = vmul.f32 %v332, %v337
    %341 = vrot.lane.b32.xlu0 %v339, 32
    %v342 = vpop.permute.xlu0 %341
    %v344 = vadd.f32 %v334, %v342
    %v345 = vtanh.pop %v344
    %347 = vrot.lane.b32.xlu0 %v345, 32
    %v348 = vpop.permute.xlu0 %347
    %v350 = vmul.f32 %v332, %v348
    %352 = vrot.lane.b32.xlu0 %v350, 64
    %v353 = vpop.permute.xlu0 %352
    %355 = vst.msk [vmem:[#allocation3 + $0x10] sm:$0xff] %vm157, %v353
    %v356 = vld [vmem:[#allocation2 + $0x18] sm:$0xff]
    %v357 = vsel %vm157, %v353, 0
    %359 = vmatpush.msra.mxu0 0.0
    %360 = vmatpush.msra.mxu0 0.0
    %361 = vmatpush.msra.mxu0 0.0
    %362 = vmatpush.msra.mxu0 0.0
    %363 = vmatpush.msra.mxu0 0.0
    %364 = vmatpush.msra.mxu0 0.0
    %365 = vmatpush.msra.mxu0 0.0
    %366 = vmatpush.msra.mxu0 0.0
    %367 = vmatpush.msra.mxu0 0.0
    %368 = vmatpush.msra.mxu0 0.0
    %369 = vmatpush.msra.mxu0 0.0
    %370 = vmatpush.msra.mxu0 0.0
    %371 = vmatpush.msra.mxu0 %v155
    %372 = vmatpush.msra.mxu0 %v154
    %373 = vmatpush.msra.mxu0 %v153
    %374 = vmatpush.msra.mxu0 %v152
    %375 = vmatmul.f32.gmra.mxu0 %v357
    %v376 = vpop.f32.mrf.mxu0
    %v377 = vadd.f32 0.0, %v376
    %378 = vdwg.mxu0
    %v379 = vadd.f32 %v356, %v377
    %v380 = vxor.u32 %v379, 2147483648
    %v381 = vmul.f32 %v380, 1.442695
    %v382 = vpow.pop %v381
    %v383 = vadd.f32 %v382, 1.0
    %v384 = vrcp.pop %v383
    %v385 = vmul.f32 %v383, %v384
    %v386 = vsub.f32 1.0, %v385
    %v387 = vmul.f32 %v384, %v386
    %v388 = vadd.f32 %v384, %v387
    %vm389 = vweird.f32 %v383
    %vm390 = vweird.f32 %v384
    %vm391 = vmor %vm389, %vm390
    %v392 = vsel %vm391, %v384, %v388
    %v393 = vand.u32 2147483647, %v383
    %vm394 = vcmp.eq.f32.partialorder %v393, 8.507059e+37
    %v395 = vand.u32 %v383, 2147483648
    %v396 = vor.u32 1.1754944e-38, %v395
    %v397 = vsel %vm394, %v396, %v392
    %v398 = vmul.f32 1.0, %v397
    %v399 = vtanh.pop %v379
    %v400 = vmul.f32 %v398, %v344
    %402 = vrot.lane.b32.xlu0 %v399, 32
    %v403 = vpop.permute.xlu0 %402
    %v405 = vmul.f32 %v398, %v403
    %407 = vrot.lane.b32.xlu0 %v405, 32
    %v408 = vpop.permute.xlu0 %407
    %v410 = vadd.f32 %v400, %v408
    %v411 = vtanh.pop %v410
    %413 = vrot.lane.b32.xlu0 %v411, 32
    %v414 = vpop.permute.xlu0 %413
    %v416 = vmul.f32 %v398, %v414
    %418 = vrot.lane.b32.xlu0 %v416, 64
    %v419 = vpop.permute.xlu0 %418
    %421 = vst.msk [vmem:[#allocation3 + $0x18] sm:$0xff] %vm157, %v419
    %v422 = vld [vmem:[#allocation2 + $0x20] sm:$0xff]
    %v423 = vsel %vm157, %v419, 0
    %425 = vmatpush.msra.mxu0 0.0
    %426 = vmatpush.msra.mxu0 0.0
    %427 = vmatpush.msra.mxu0 0.0
    %428 = vmatpush.msra.mxu0 0.0
    %429 = vmatpush.msra.mxu0 0.0
    %430 = vmatpush.msra.mxu0 0.0
    %431 = vmatpush.msra.mxu0 0.0
    %432 = vmatpush.msra.mxu0 0.0
    %433 = vmatpush.msra.mxu0 0.0
    %434 = vmatpush.msra.mxu0 0.0
    %435 = vmatpush.msra.mxu0 0.0
    %436 = vmatpush.msra.mxu0 0.0
    %437 = vmatpush.msra.mxu0 %v155
    %438 = vmatpush.msra.mxu0 %v154
    %439 = vmatpush.msra.mxu0 %v153
    %440 = vmatpush.msra.mxu0 %v152
    %441 = vmatmul.f32.gmra.mxu0 %v423
    %v442 = vpop.f32.mrf.mxu0
    %v443 = vadd.f32 0.0, %v442
    %444 = vdwg.mxu0
    %v445 = vadd.f32 %v422, %v443
    %v446 = vxor.u32 %v445, 2147483648
    %v447 = vmul.f32 %v446, 1.442695
    %v448 = vpow.pop %v447
    %v449 = vadd.f32 %v448, 1.0
    %v450 = vrcp.pop %v449
    %v451 = vmul.f32 %v449, %v450
    %v452 = vsub.f32 1.0, %v451
    %v453 = vmul.f32 %v450, %v452
    %v454 = vadd.f32 %v450, %v453
    %vm455 = vweird.f32 %v449
    %vm456 = vweird.f32 %v450
    %vm457 = vmor %vm455, %vm456
    %v458 = vsel %vm457, %v450, %v454
    %v459 = vand.u32 2147483647, %v449
    %vm460 = vcmp.eq.f32.partialorder %v459, 8.507059e+37
    %v461 = vand.u32 %v449, 2147483648
    %v462 = vor.u32 1.1754944e-38, %v461
    %v463 = vsel %vm460, %v462, %v458
    %v464 = vmul.f32 1.0, %v463
    %v465 = vtanh.pop %v445
    %v466 = vmul.f32 %v464, %v410
    %468 = vrot.lane.b32.xlu0 %v465, 32
    %v469 = vpop.permute.xlu0 %468
    %v471 = vmul.f32 %v464, %v469
    %473 = vrot.lane.b32.xlu0 %v471, 32
    %v474 = vpop.permute.xlu0 %473
    %v476 = vadd.f32 %v466, %v474
    %v477 = vtanh.pop %v476
    %479 = vrot.lane.b32.xlu0 %v477, 32
    %v480 = vpop.permute.xlu0 %479
    %v482 = vmul.f32 %v464, %v480
    %484 = vrot.lane.b32.xlu0 %v482, 64
    %v485 = vpop.permute.xlu0 %484
    %487 = vst.msk [vmem:[#allocation3 + $0x20] sm:$0xff] %vm157, %v485
    %v488 = vld [vmem:[#allocation2 + $0x28] sm:$0xff]
    %v489 = vsel %vm157, %v485, 0
    %491 = vmatpush.msra.mxu0 0.0
    %492 = vmatpush.msra.mxu0 0.0
    %493 = vmatpush.msra.mxu0 0.0
    %494 = vmatpush.msra.mxu0 0.0
    %495 = vmatpush.msra.mxu0 0.0
    %496 = vmatpush.msra.mxu0 0.0
    %497 = vmatpush.msra.mxu0 0.0
    %498 = vmatpush.msra.mxu0 0.0
    %499 = vmatpush.msra.mxu0 0.0
    %500 = vmatpush.msra.mxu0 0.0
    %501 = vmatpush.msra.mxu0 0.0
    %502 = vmatpush.msra.mxu0 0.0
    %503 = vmatpush.msra.mxu0 %v155
    %504 = vmatpush.msra.mxu0 %v154
    %505 = vmatpush.msra.mxu0 %v153
    %506 = vmatpush.msra.mxu0 %v152
    %507 = vmatmul.f32.gmra.mxu0 %v489
    %v508 = vpop.f32.mrf.mxu0
    %v509 = vadd.f32 0.0, %v508
    %510 = vdwg.mxu0
    %v511 = vadd.f32 %v488, %v509
    %v512 = vxor.u32 %v511, 2147483648
    %v513 = vmul.f32 %v512, 1.442695
    %v514 = vpow.pop %v513
    %v515 = vadd.f32 %v514, 1.0
    %v516 = vrcp.pop %v515
    %v517 = vmul.f32 %v515, %v516
    %v518 = vsub.f32 1.0, %v517
    %v519 = vmul.f32 %v516, %v518
    %v520 = vadd.f32 %v516, %v519
    %vm521 = vweird.f32 %v515
    %vm522 = vweird.f32 %v516
    %vm523 = vmor %vm521, %vm522
    %v524 = vsel %vm523, %v516, %v520
    %v525 = vand.u32 2147483647, %v515
    %vm526 = vcmp.eq.f32.partialorder %v525, 8.507059e+37
    %v527 = vand.u32 %v515, 2147483648
    %v528 = vor.u32 1.1754944e-38, %v527
    %v529 = vsel %vm526, %v528, %v524
    %v530 = vmul.f32 1.0, %v529
    %v531 = vtanh.pop %v511
    %v532 = vmul.f32 %v530, %v476
    %534 = vrot.lane.b32.xlu0 %v531, 32
    %v535 = vpop.permute.xlu0 %534
    %v537 = vmul.f32 %v530, %v535
    %539 = vrot.lane.b32.xlu0 %v537, 32
    %v540 = vpop.permute.xlu0 %539
    %v542 = vadd.f32 %v532, %v540
    %v543 = vtanh.pop %v542
    %545 = vrot.lane.b32.xlu0 %v543, 32
    %v546 = vpop.permute.xlu0 %545
    %v548 = vmul.f32 %v530, %v546
    %550 = vrot.lane.b32.xlu0 %v548, 64
    %v551 = vpop.permute.xlu0 %550
    %553 = vst.msk [vmem:[#allocation3 + $0x28] sm:$0xff] %vm157, %v551
    %v554 = vld [vmem:[#allocation2 + $0x30] sm:$0xff]
    %v555 = vsel %vm157, %v551, 0
    %557 = vmatpush.msra.mxu0 0.0
    %558 = vmatpush.msra.mxu0 0.0
    %559 = vmatpush.msra.mxu0 0.0
    %560 = vmatpush.msra.mxu0 0.0
    %561 = vmatpush.msra.mxu0 0.0
    %562 = vmatpush.msra.mxu0 0.0
    %563 = vmatpush.msra.mxu0 0.0
    %564 = vmatpush.msra.mxu0 0.0
    %565 = vmatpush.msra.mxu0 0.0
    %566 = vmatpush.msra.mxu0 0.0
    %567 = vmatpush.msra.mxu0 0.0
    %568 = vmatpush.msra.mxu0 0.0
    %569 = vmatpush.msra.mxu0 %v155
    %570 = vmatpush.msra.mxu0 %v154
    %571 = vmatpush.msra.mxu0 %v153
    %572 = vmatpush.msra.mxu0 %v152
    %573 = vmatmul.f32.gmra.mxu0 %v555
    %v574 = vpop.f32.mrf.mxu0
    %v575 = vadd.f32 0.0, %v574
    %576 = vdwg.mxu0
    %v577 = vadd.f32 %v554, %v575
    %v578 = vxor.u32 %v577, 2147483648
    %v579 = vmul.f32 %v578, 1.442695
    %v580 = vpow.pop %v579
    %v581 = vadd.f32 %v580, 1.0
    %v582 = vrcp.pop %v581
    %v583 = vmul.f32 %v581, %v582
    %v584 = vsub.f32 1.0, %v583
    %v585 = vmul.f32 %v582, %v584
    %v586 = vadd.f32 %v582, %v585
    %vm587 = vweird.f32 %v581
    %vm588 = vweird.f32 %v582
    %vm589 = vmor %vm587, %vm588
    %v590 = vsel %vm589, %v582, %v586
    %v591 = vand.u32 2147483647, %v581
    %vm592 = vcmp.eq.f32.partialorder %v591, 8.507059e+37
    %v593 = vand.u32 %v581, 2147483648
    %v594 = vor.u32 1.1754944e-38, %v593
    %v595 = vsel %vm592, %v594, %v590
    %v596 = vmul.f32 1.0, %v595
    %v597 = vtanh.pop %v577
    %v598 = vmul.f32 %v596, %v542
    %600 = vrot.lane.b32.xlu0 %v597, 32
    %v601 = vpop.permute.xlu0 %600
    %v603 = vmul.f32 %v596, %v601
    %605 = vrot.lane.b32.xlu0 %v603, 32
    %v606 = vpop.permute.xlu0 %605
    %v608 = vadd.f32 %v598, %v606
    %v609 = vtanh.pop %v608
    %611 = vrot.lane.b32.xlu0 %v609, 32
    %v612 = vpop.permute.xlu0 %611
    %v614 = vmul.f32 %v596, %v612
    %616 = vrot.lane.b32.xlu0 %v614, 64
    %v617 = vpop.permute.xlu0 %616
    %619 = vst.msk [vmem:[#allocation3 + $0x30] sm:$0xff] %vm157, %v617
    %v620 = vld [vmem:[#allocation2 + $0x38] sm:$0xff]
    %v621 = vsel %vm157, %v617, 0
    %623 = vmatpush.msra.mxu0 0.0
    %624 = vmatpush.msra.mxu0 0.0
    %625 = vmatpush.msra.mxu0 0.0
    %626 = vmatpush.msra.mxu0 0.0
    %627 = vmatpush.msra.mxu0 0.0
    %628 = vmatpush.msra.mxu0 0.0
    %629 = vmatpush.msra.mxu0 0.0
    %630 = vmatpush.msra.mxu0 0.0
    %631 = vmatpush.msra.mxu0 0.0
    %632 = vmatpush.msra.mxu0 0.0
    %633 = vmatpush.msra.mxu0 0.0
    %634 = vmatpush.msra.mxu0 0.0
    %635 = vmatpush.msra.mxu0 %v155
    %636 = vmatpush.msra.mxu0 %v154
    %637 = vmatpush.msra.mxu0 %v153
    %638 = vmatpush.msra.mxu0 %v152
    %639 = vmatmul.f32.gmra.mxu0 %v621
    %v640 = vpop.f32.mrf.mxu0
    %v641 = vadd.f32 0.0, %v640
    %642 = vdwg.mxu0
    %v643 = vadd.f32 %v620, %v641
    %v644 = vxor.u32 %v643, 2147483648
    %v645 = vmul.f32 %v644, 1.442695
    %v646 = vpow.pop %v645
    %v647 = vadd.f32 %v646, 1.0
    %v648 = vrcp.pop %v647
    %v649 = vmul.f32 %v647, %v648
    %v650 = vsub.f32 1.0, %v649
    %v651 = vmul.f32 %v648, %v650
    %v652 = vadd.f32 %v648, %v651
    %vm653 = vweird.f32 %v647
    %vm654 = vweird.f32 %v648
    %vm655 = vmor %vm653, %vm654
    %v656 = vsel %vm655, %v648, %v652
    %v657 = vand.u32 2147483647, %v647
    %vm658 = vcmp.eq.f32.partialorder %v657, 8.507059e+37
    %v659 = vand.u32 %v647, 2147483648
    %v660 = vor.u32 1.1754944e-38, %v659
    %v661 = vsel %vm658, %v660, %v656
    %v662 = vmul.f32 1.0, %v661
    %v663 = vtanh.pop %v643
    %v664 = vmul.f32 %v662, %v608
    %666 = vrot.lane.b32.xlu0 %v663, 32
    %v667 = vpop.permute.xlu0 %666
    %v669 = vmul.f32 %v662, %v667
    %671 = vrot.lane.b32.xlu0 %v669, 32
    %v672 = vpop.permute.xlu0 %671
    %v674 = vadd.f32 %v664, %v672
    %v675 = vtanh.pop %v674
    %677 = vrot.lane.b32.xlu0 %v675, 32
    %v678 = vpop.permute.xlu0 %677
    %v680 = vmul.f32 %v662, %v678
    %682 = vrot.lane.b32.xlu0 %v680, 64
    %v683 = vpop.permute.xlu0 %682
    %685 = vst.msk [vmem:[#allocation3 + $0x38] sm:$0xff] %vm157, %v683
    %v686 = vld [vmem:[#allocation3] sm:$0xff]
    %v687 = vld [vmem:[#allocation3 + $0x8] sm:$0xff]
    %v688 = vld [vmem:[#allocation3 + $0x10] sm:$0xff]
    %v689 = vld [vmem:[#allocation3 + $0x18] sm:$0xff]
    %v690 = vld [vmem:[#allocation3 + $0x20] sm:$0xff]
    %v691 = vld [vmem:[#allocation3 + $0x28] sm:$0xff]
    %v692 = vld [vmem:[#allocation3 + $0x30] sm:$0xff]
    %v693 = vld [vmem:[#allocation3 + $0x38] sm:$0xff]
    %v694 = vld [vmem:[%s4] sm:$0xff]
    %v695 = vld [vmem:[%s4 + $0x8] sm:$0xff]
    %v696 = vld [vmem:[%s4 + $0x10] sm:$0xff]
    %v697 = vld [vmem:[%s4 + $0x18] sm:$0xff]
    %v698 = vld [vmem:[%s6] sm:$0x1]
    %v700 = vperm.slane %v698, 0
    %v703 = vsel %vm157, %v686, 0
    %v706 = vsel %vm157, %v687, 0
    %v709 = vsel %vm157, %v688, 0
    %v712 = vsel %vm157, %v689, 0
    %v715 = vsel %vm157, %v690, 0
    %v718 = vsel %vm157, %v691, 0
    %v721 = vsel %vm157, %v692, 0
    %v724 = vsel %vm157, %v693, 0
    %726 = vmatpush.msra.mxu0 0.0
    %727 = vmatpush.msra.mxu0 0.0
    %728 = vmatpush.msra.mxu0 0.0
    %729 = vmatpush.msra.mxu0 0.0
    %730 = vmatpush.msra.mxu0 0.0
    %731 = vmatpush.msra.mxu0 0.0
    %732 = vmatpush.msra.mxu0 0.0
    %733 = vmatpush.msra.mxu0 0.0
    %734 = vmatpush.msra.mxu0 0.0
    %735 = vmatpush.msra.mxu0 0.0
    %736 = vmatpush.msra.mxu0 0.0
    %737 = vmatpush.msra.mxu0 0.0
    %738 = vmatpush.msra.mxu0 %v697
    %739 = vmatpush.msra.mxu0 %v696
    %740 = vmatpush.msra.mxu0 %v695
    %741 = vmatpush.msra.mxu0 %v694
    %742 = vmatmul.f32.gmra.mxu0 %v703
    %v743 = vpop.f32.mrf.mxu0
    %v744 = vadd.f32 %v700, %v743
    %745 = vmatmul.f32.gmra.mxu0 %v706
    %v746 = vpop.f32.mrf.mxu0
    %v747 = vadd.f32 %v700, %v746
    %748 = vmatmul.f32.gmra.mxu0 %v709
    %v749 = vpop.f32.mrf.mxu0
    %v750 = vadd.f32 %v700, %v749
    %751 = vmatmul.f32.gmra.mxu0 %v712
    %v752 = vpop.f32.mrf.mxu0
    %v753 = vadd.f32 %v700, %v752
    %754 = vmatmul.f32.gmra.mxu0 %v715
    %v755 = vpop.f32.mrf.mxu0
    %v756 = vadd.f32 %v700, %v755
    %757 = vmatmul.f32.gmra.mxu0 %v718
    %v758 = vpop.f32.mrf.mxu0
    %v759 = vadd.f32 %v700, %v758
    %760 = vmatmul.f32.gmra.mxu0 %v721
    %v761 = vpop.f32.mrf.mxu0
    %v762 = vadd.f32 %v700, %v761
    %763 = vmatmul.f32.gmra.mxu0 %v724
    %v764 = vpop.f32.mrf.mxu0
    %v765 = vadd.f32 %v700, %v764
    %766 = vdwg.mxu0
    %767 = vst [vmem:[#allocation2] sm:$0xff] %v744
    %768 = vst [vmem:[#allocation2 + $0x8] sm:$0xff] %v747
    %769 = vst [vmem:[#allocation2 + $0x10] sm:$0xff] %v750
    %770 = vst [vmem:[#allocation2 + $0x18] sm:$0xff] %v753
    %771 = vst [vmem:[#allocation2 + $0x20] sm:$0xff] %v756
    %772 = vst [vmem:[#allocation2 + $0x28] sm:$0xff] %v759
    %773 = vst [vmem:[#allocation2 + $0x30] sm:$0xff] %v762
    %774 = vst [vmem:[#allocation2 + $0x38] sm:$0xff] %v765
    %v775 = vld [vmem:[#allocation4] sm:$0xff]
    %v776 = vld [vmem:[#allocation4 + $0x8] sm:$0xff]
    %v777 = vld [vmem:[#allocation4 + $0x10] sm:$0xff]
    %v778 = vld [vmem:[#allocation4 + $0x18] sm:$0xff]
    %v779 = vld [vmem:[#allocation2] sm:$0xff]
    %780 = vmatpush.msra.mxu0 0.0
    %781 = vmatpush.msra.mxu0 0.0
    %782 = vmatpush.msra.mxu0 0.0
    %783 = vmatpush.msra.mxu0 0.0
    %784 = vmatpush.msra.mxu0 0.0
    %785 = vmatpush.msra.mxu0 0.0
    %786 = vmatpush.msra.mxu0 0.0
    %787 = vmatpush.msra.mxu0 0.0
    %788 = vmatpush.msra.mxu0 0.0
    %789 = vmatpush.msra.mxu0 0.0
    %790 = vmatpush.msra.mxu0 0.0
    %791 = vmatpush.msra.mxu0 0.0
    %792 = vmatpush.msra.mxu0 %v778
    %793 = vmatpush.msra.mxu0 %v777
    %794 = vmatpush.msra.mxu0 %v776
    %795 = vmatpush.msra.mxu0 %v775
    %796 = vmatmul.f32.gmra.mxu0 %v159
    %v797 = vpop.f32.mrf.mxu0
    %v798 = vadd.f32 0.0, %v797
    %799 = vdwg.mxu0
    %v800 = vadd.f32 %v779, %v798
    %v801 = vxor.u32 %v800, 2147483648
    %v802 = vmul.f32 %v801, 1.442695
    %v803 = vpow.pop %v802
    %v804 = vadd.f32 %v803, 1.0
    %v805 = vrcp.pop %v804
    %v806 = vmul.f32 %v804, %v805
    %v807 = vsub.f32 1.0, %v806
    %v808 = vmul.f32 %v805, %v807
    %v809 = vadd.f32 %v805, %v808
    %vm810 = vweird.f32 %v804
    %vm811 = vweird.f32 %v805
    %vm812 = vmor %vm810, %vm811
    %v813 = vsel %vm812, %v805, %v809
    %v814 = vand.u32 2147483647, %v804
    %vm815 = vcmp.eq.f32.partialorder %v814, 8.507059e+37
    %v816 = vand.u32 %v804, 2147483648
    %v817 = vor.u32 1.1754944e-38, %v816
    %v818 = vsel %vm815, %v817, %v813
    %v819 = vmul.f32 1.0, %v818
    %v820 = vtanh.pop %v800
    %v821 = vmul.f32 %v819, 0.0
    %823 = vrot.lane.b32.xlu0 %v820, 32
    %v824 = vpop.permute.xlu0 %823
    %v826 = vmul.f32 %v819, %v824
    %828 = vrot.lane.b32.xlu0 %v826, 32
    %v829 = vpop.permute.xlu0 %828
    %v831 = vadd.f32 %v821, %v829
    %v832 = vtanh.pop %v831
    %834 = vrot.lane.b32.xlu0 %v832, 32
    %v835 = vpop.permute.xlu0 %834
    %v837 = vmul.f32 %v819, %v835
    %v838 = vld [vmem:[#allocation2 + $0x8] sm:$0xff]
    %840 = vrot.lane.b32.xlu0 %v837, 64
    %v841 = vpop.permute.xlu0 %840
    %v842 = vsel %vm157, %v841, 0
    %844 = vmatpush.msra.mxu0 0.0
    %845 = vmatpush.msra.mxu0 0.0
    %846 = vmatpush.msra.mxu0 0.0
    %847 = vmatpush.msra.mxu0 0.0
    %848 = vmatpush.msra.mxu0 0.0
    %849 = vmatpush.msra.mxu0 0.0
    %850 = vmatpush.msra.mxu0 0.0
    %851 = vmatpush.msra.mxu0 0.0
    %852 = vmatpush.msra.mxu0 0.0
    %853 = vmatpush.msra.mxu0 0.0
    %854 = vmatpush.msra.mxu0 0.0
    %855 = vmatpush.msra.mxu0 0.0
    %856 = vmatpush.msra.mxu0 %v778
    %857 = vmatpush.msra.mxu0 %v777
    %858 = vmatpush.msra.mxu0 %v776
    %859 = vmatpush.msra.mxu0 %v775
    %860 = vmatmul.f32.gmra.mxu0 %v842
    %v861 = vpop.f32.mrf.mxu0
    %v862 = vadd.f32 0.0, %v861
    %863 = vdwg.mxu0
    %v864 = vadd.f32 %v838, %v862
    %v865 = vxor.u32 %v864, 2147483648
    %v866 = vmul.f32 %v865, 1.442695
    %v867 = vpow.pop %v866
    %v868 = vadd.f32 %v867, 1.0
    %v869 = vrcp.pop %v868
    %v870 = vmul.f32 %v868, %v869
    %v871 = vsub.f32 1.0, %v870
    %v872 = vmul.f32 %v869, %v871
    %v873 = vadd.f32 %v869, %v872
    %vm874 = vweird.f32 %v868
    %vm875 = vweird.f32 %v869
    %vm876 = vmor %vm874, %vm875
    %v877 = vsel %vm876, %v869, %v873
    %v878 = vand.u32 2147483647, %v868
    %vm879 = vcmp.eq.f32.partialorder %v878, 8.507059e+37
    %v880 = vand.u32 %v868, 2147483648
    %v881 = vor.u32 1.1754944e-38, %v880
    %v882 = vsel %vm879, %v881, %v877
    %v883 = vmul.f32 1.0, %v882
    %v884 = vtanh.pop %v864
    %v885 = vmul.f32 %v883, %v831
    %887 = vrot.lane.b32.xlu0 %v884, 32
    %v888 = vpop.permute.xlu0 %887
    %v890 = vmul.f32 %v883, %v888
    %892 = vrot.lane.b32.xlu0 %v890, 32
    %v893 = vpop.permute.xlu0 %892
    %v895 = vadd.f32 %v885, %v893
    %v896 = vtanh.pop %v895
    %898 = vrot.lane.b32.xlu0 %v896, 32
    %v899 = vpop.permute.xlu0 %898
    %v901 = vmul.f32 %v883, %v899
    %v902 = vld [vmem:[#allocation2 + $0x10] sm:$0xff]
    %904 = vrot.lane.b32.xlu0 %v901, 64
    %v905 = vpop.permute.xlu0 %904
    %v906 = vsel %vm157, %v905, 0
    %908 = vmatpush.msra.mxu0 0.0
    %909 = vmatpush.msra.mxu0 0.0
    %910 = vmatpush.msra.mxu0 0.0
    %911 = vmatpush.msra.mxu0 0.0
    %912 = vmatpush.msra.mxu0 0.0
    %913 = vmatpush.msra.mxu0 0.0
    %914 = vmatpush.msra.mxu0 0.0
    %915 = vmatpush.msra.mxu0 0.0
    %916 = vmatpush.msra.mxu0 0.0
    %917 = vmatpush.msra.mxu0 0.0
    %918 = vmatpush.msra.mxu0 0.0
    %919 = vmatpush.msra.mxu0 0.0
    %920 = vmatpush.msra.mxu0 %v778
    %921 = vmatpush.msra.mxu0 %v777
    %922 = vmatpush.msra.mxu0 %v776
    %923 = vmatpush.msra.mxu0 %v775
    %924 = vmatmul.f32.gmra.mxu0 %v906
    %v925 = vpop.f32.mrf.mxu0
    %v926 = vadd.f32 0.0, %v925
    %927 = vdwg.mxu0
    %v928 = vadd.f32 %v902, %v926
    %v929 = vxor.u32 %v928, 2147483648
    %v930 = vmul.f32 %v929, 1.442695
    %v931 = vpow.pop %v930
    %v932 = vadd.f32 %v931, 1.0
    %v933 = vrcp.pop %v932
    %v934 = vmul.f32 %v932, %v933
    %v935 = vsub.f32 1.0, %v934
    %v936 = vmul.f32 %v933, %v935
    %v937 = vadd.f32 %v933, %v936
    %vm938 = vweird.f32 %v932
    %vm939 = vweird.f32 %v933
    %vm940 = vmor %vm938, %vm939
    %v941 = vsel %vm940, %v933, %v937
    %v942 = vand.u32 2147483647, %v932
    %vm943 = vcmp.eq.f32.partialorder %v942, 8.507059e+37
    %v944 = vand.u32 %v932, 2147483648
    %v945 = vor.u32 1.1754944e-38, %v944
    %v946 = vsel %vm943, %v945, %v941
    %v947 = vmul.f32 1.0, %v946
    %v948 = vtanh.pop %v928
    %v949 = vmul.f32 %v947, %v895
    %951 = vrot.lane.b32.xlu0 %v948, 32
    %v952 = vpop.permute.xlu0 %951
    %v954 = vmul.f32 %v947, %v952
    %956 = vrot.lane.b32.xlu0 %v954, 32
    %v957 = vpop.permute.xlu0 %956
    %v959 = vadd.f32 %v949, %v957
    %v960 = vtanh.pop %v959
    %962 = vrot.lane.b32.xlu0 %v960, 32
    %v963 = vpop.permute.xlu0 %962
    %v965 = vmul.f32 %v947, %v963
    %v966 = vld [vmem:[#allocation2 + $0x18] sm:$0xff]
    %968 = vrot.lane.b32.xlu0 %v965, 64
    %v969 = vpop.permute.xlu0 %968
    %v970 = vsel %vm157, %v969, 0
    %972 = vmatpush.msra.mxu0 0.0
    %973 = vmatpush.msra.mxu0 0.0
    %974 = vmatpush.msra.mxu0 0.0
    %975 = vmatpush.msra.mxu0 0.0
    %976 = vmatpush.msra.mxu0 0.0
    %977 = vmatpush.msra.mxu0 0.0
    %978 = vmatpush.msra.mxu0 0.0
    %979 = vmatpush.msra.mxu0 0.0
    %980 = vmatpush.msra.mxu0 0.0
    %981 = vmatpush.msra.mxu0 0.0
    %982 = vmatpush.msra.mxu0 0.0
    %983 = vmatpush.msra.mxu0 0.0
    %984 = vmatpush.msra.mxu0 %v778
    %985 = vmatpush.msra.mxu0 %v777
    %986 = vmatpush.msra.mxu0 %v776
    %987 = vmatpush.msra.mxu0 %v775
    %988 = vmatmul.f32.gmra.mxu0 %v970
    %v989 = vpop.f32.mrf.mxu0
    %v990 = vadd.f32 0.0, %v989
    %991 = vdwg.mxu0
    %v992 = vadd.f32 %v966, %v990
    %v993 = vxor.u32 %v992, 2147483648
    %v994 = vmul.f32 %v993, 1.442695
    %v995 = vpow.pop %v994
    %v996 = vadd.f32 %v995, 1.0
    %v997 = vrcp.pop %v996
    %v998 = vmul.f32 %v996, %v997
    %v999 = vsub.f32 1.0, %v998
    %v1000 = vmul.f32 %v997, %v999
    %v1001 = vadd.f32 %v997, %v1000
    %vm1002 = vweird.f32 %v996
    %vm1003 = vweird.f32 %v997
    %vm1004 = vmor %vm1002, %vm1003
    %v1005 = vsel %vm1004, %v997, %v1001
    %v1006 = vand.u32 2147483647, %v996
    %vm1007 = vcmp.eq.f32.partialorder %v1006, 8.507059e+37
    %v1008 = vand.u32 %v996, 2147483648
    %v1009 = vor.u32 1.1754944e-38, %v1008
    %v1010 = vsel %vm1007, %v1009, %v1005
    %v1011 = vmul.f32 1.0, %v1010
    %v1012 = vtanh.pop %v992
    %v1013 = vmul.f32 %v1011, %v959
    %1015 = vrot.lane.b32.xlu0 %v1012, 32
    %v1016 = vpop.permute.xlu0 %1015
    %v1018 = vmul.f32 %v1011, %v1016
    %1020 = vrot.lane.b32.xlu0 %v1018, 32
    %v1021 = vpop.permute.xlu0 %1020
    %v1023 = vadd.f32 %v1013, %v1021
    %v1024 = vtanh.pop %v1023
    %1026 = vrot.lane.b32.xlu0 %v1024, 32
    %v1027 = vpop.permute.xlu0 %1026
    %v1029 = vmul.f32 %v1011, %v1027
    %v1030 = vld [vmem:[#allocation2 + $0x20] sm:$0xff]
    %1032 = vrot.lane.b32.xlu0 %v1029, 64
    %v1033 = vpop.permute.xlu0 %1032
    %v1034 = vsel %vm157, %v1033, 0
    %1036 = vmatpush.msra.mxu0 0.0
    %1037 = vmatpush.msra.mxu0 0.0
    %1038 = vmatpush.msra.mxu0 0.0
    %1039 = vmatpush.msra.mxu0 0.0
    %1040 = vmatpush.msra.mxu0 0.0
    %1041 = vmatpush.msra.mxu0 0.0
    %1042 = vmatpush.msra.mxu0 0.0
    %1043 = vmatpush.msra.mxu0 0.0
    %1044 = vmatpush.msra.mxu0 0.0
    %1045 = vmatpush.msra.mxu0 0.0
    %1046 = vmatpush.msra.mxu0 0.0
    %1047 = vmatpush.msra.mxu0 0.0
    %1048 = vmatpush.msra.mxu0 %v778
    %1049 = vmatpush.msra.mxu0 %v777
    %1050 = vmatpush.msra.mxu0 %v776
    %1051 = vmatpush.msra.mxu0 %v775
    %1052 = vmatmul.f32.gmra.mxu0 %v1034
    %v1053 = vpop.f32.mrf.mxu0
    %v1054 = vadd.f32 0.0, %v1053
    %1055 = vdwg.mxu0
    %v1056 = vadd.f32 %v1030, %v1054
    %v1057 = vxor.u32 %v1056, 2147483648
    %v1058 = vmul.f32 %v1057, 1.442695
    %v1059 = vpow.pop %v1058
    %v1060 = vadd.f32 %v1059, 1.0
    %v1061 = vrcp.pop %v1060
    %v1062 = vmul.f32 %v1060, %v1061
    %v1063 = vsub.f32 1.0, %v1062
    %v1064 = vmul.f32 %v1061, %v1063
    %v1065 = vadd.f32 %v1061, %v1064
    %vm1066 = vweird.f32 %v1060
    %vm1067 = vweird.f32 %v1061
    %vm1068 = vmor %vm1066, %vm1067
    %v1069 = vsel %vm1068, %v1061, %v1065
    %v1070 = vand.u32 2147483647, %v1060
    %vm1071 = vcmp.eq.f32.partialorder %v1070, 8.507059e+37
    %v1072 = vand.u32 %v1060, 2147483648
    %v1073 = vor.u32 1.1754944e-38, %v1072
    %v1074 = vsel %vm1071, %v1073, %v1069
    %v1075 = vmul.f32 1.0, %v1074
    %v1076 = vtanh.pop %v1056
    %v1077 = vmul.f32 %v1075, %v1023
    %1079 = vrot.lane.b32.xlu0 %v1076, 32
    %v1080 = vpop.permute.xlu0 %1079
    %v1082 = vmul.f32 %v1075, %v1080
    %1084 = vrot.lane.b32.xlu0 %v1082, 32
    %v1085 = vpop.permute.xlu0 %1084
    %v1087 = vadd.f32 %v1077, %v1085
    %v1088 = vtanh.pop %v1087
    %1090 = vrot.lane.b32.xlu0 %v1088, 32
    %v1091 = vpop.permute.xlu0 %1090
    %v1093 = vmul.f32 %v1075, %v1091
    %v1094 = vld [vmem:[#allocation2 + $0x28] sm:$0xff]
    %1096 = vrot.lane.b32.xlu0 %v1093, 64
    %v1097 = vpop.permute.xlu0 %1096
    %v1098 = vsel %vm157, %v1097, 0
    %1100 = vmatpush.msra.mxu0 0.0
    %1101 = vmatpush.msra.mxu0 0.0
    %1102 = vmatpush.msra.mxu0 0.0
    %1103 = vmatpush.msra.mxu0 0.0
    %1104 = vmatpush.msra.mxu0 0.0
    %1105 = vmatpush.msra.mxu0 0.0
    %1106 = vmatpush.msra.mxu0 0.0
    %1107 = vmatpush.msra.mxu0 0.0
    %1108 = vmatpush.msra.mxu0 0.0
    %1109 = vmatpush.msra.mxu0 0.0
    %1110 = vmatpush.msra.mxu0 0.0
    %1111 = vmatpush.msra.mxu0 0.0
    %1112 = vmatpush.msra.mxu0 %v778
    %1113 = vmatpush.msra.mxu0 %v777
    %1114 = vmatpush.msra.mxu0 %v776
    %1115 = vmatpush.msra.mxu0 %v775
    %1116 = vmatmul.f32.gmra.mxu0 %v1098
    %v1117 = vpop.f32.mrf.mxu0
    %v1118 = vadd.f32 0.0, %v1117
    %1119 = vdwg.mxu0
    %v1120 = vadd.f32 %v1094, %v1118
    %v1121 = vxor.u32 %v1120, 2147483648
    %v1122 = vmul.f32 %v1121, 1.442695
    %v1123 = vpow.pop %v1122
    %v1124 = vadd.f32 %v1123, 1.0
    %v1125 = vrcp.pop %v1124
    %v1126 = vmul.f32 %v1124, %v1125
    %v1127 = vsub.f32 1.0, %v1126
    %v1128 = vmul.f32 %v1125, %v1127
    %v1129 = vadd.f32 %v1125, %v1128
    %vm1130 = vweird.f32 %v1124
    %vm1131 = vweird.f32 %v1125
    %vm1132 = vmor %vm1130, %vm1131
    %v1133 = vsel %vm1132, %v1125, %v1129
    %v1134 = vand.u32 2147483647, %v1124
    %vm1135 = vcmp.eq.f32.partialorder %v1134, 8.507059e+37
    %v1136 = vand.u32 %v1124, 2147483648
    %v1137 = vor.u32 1.1754944e-38, %v1136
    %v1138 = vsel %vm1135, %v1137, %v1133
    %v1139 = vmul.f32 1.0, %v1138
    %v1140 = vtanh.pop %v1120
    %v1141 = vmul.f32 %v1139, %v1087
    %1143 = vrot.lane.b32.xlu0 %v1140, 32
    %v1144 = vpop.permute.xlu0 %1143
    %v1146 = vmul.f32 %v1139, %v1144
    %1148 = vrot.lane.b32.xlu0 %v1146, 32
    %v1149 = vpop.permute.xlu0 %1148
    %v1151 = vadd.f32 %v1141, %v1149
    %v1152 = vtanh.pop %v1151
    %1154 = vrot.lane.b32.xlu0 %v1152, 32
    %v1155 = vpop.permute.xlu0 %1154
    %v1157 = vmul.f32 %v1139, %v1155
    %v1158 = vld [vmem:[#allocation2 + $0x30] sm:$0xff]
    %1160 = vrot.lane.b32.xlu0 %v1157, 64
    %v1161 = vpop.permute.xlu0 %1160
    %v1162 = vsel %vm157, %v1161, 0
    %1164 = vmatpush.msra.mxu0 0.0
    %1165 = vmatpush.msra.mxu0 0.0
    %1166 = vmatpush.msra.mxu0 0.0
    %1167 = vmatpush.msra.mxu0 0.0
    %1168 = vmatpush.msra.mxu0 0.0
    %1169 = vmatpush.msra.mxu0 0.0
    %1170 = vmatpush.msra.mxu0 0.0
    %1171 = vmatpush.msra.mxu0 0.0
    %1172 = vmatpush.msra.mxu0 0.0
    %1173 = vmatpush.msra.mxu0 0.0
    %1174 = vmatpush.msra.mxu0 0.0
    %1175 = vmatpush.msra.mxu0 0.0
    %1176 = vmatpush.msra.mxu0 %v778
    %1177 = vmatpush.msra.mxu0 %v777
    %1178 = vmatpush.msra.mxu0 %v776
    %1179 = vmatpush.msra.mxu0 %v775
    %1180 = vmatmul.f32.gmra.mxu0 %v1162
    %v1181 = vpop.f32.mrf.mxu0
    %v1182 = vadd.f32 0.0, %v1181
    %1183 = vdwg.mxu0
    %v1184 = vadd.f32 %v1158, %v1182
    %v1185 = vxor.u32 %v1184, 2147483648
    %v1186 = vmul.f32 %v1185, 1.442695
    %v1187 = vpow.pop %v1186
    %v1188 = vadd.f32 %v1187, 1.0
    %v1189 = vrcp.pop %v1188
    %v1190 = vmul.f32 %v1188, %v1189
    %v1191 = vsub.f32 1.0, %v1190
    %v1192 = vmul.f32 %v1189, %v1191
    %v1193 = vadd.f32 %v1189, %v1192
    %vm1194 = vweird.f32 %v1188
    %vm1195 = vweird.f32 %v1189
    %vm1196 = vmor %vm1194, %vm1195
    %v1197 = vsel %vm1196, %v1189, %v1193
    %v1198 = vand.u32 2147483647, %v1188
    %vm1199 = vcmp.eq.f32.partialorder %v1198, 8.507059e+37
    %v1200 = vand.u32 %v1188, 2147483648
    %v1201 = vor.u32 1.1754944e-38, %v1200
    %v1202 = vsel %vm1199, %v1201, %v1197
    %v1203 = vmul.f32 1.0, %v1202
    %v1204 = vtanh.pop %v1184
    %v1205 = vmul.f32 %v1203, %v1151
    %1207 = vrot.lane.b32.xlu0 %v1204, 32
    %v1208 = vpop.permute.xlu0 %1207
    %v1210 = vmul.f32 %v1203, %v1208
    %1212 = vrot.lane.b32.xlu0 %v1210, 32
    %v1213 = vpop.permute.xlu0 %1212
    %v1215 = vadd.f32 %v1205, %v1213
    %v1216 = vtanh.pop %v1215
    %1218 = vrot.lane.b32.xlu0 %v1216, 32
    %v1219 = vpop.permute.xlu0 %1218
    %v1221 = vmul.f32 %v1203, %v1219
    %v1222 = vld [vmem:[#allocation2 + $0x38] sm:$0xff]
    %1224 = vrot.lane.b32.xlu0 %v1221, 64
    %v1225 = vpop.permute.xlu0 %1224
    %v1226 = vsel %vm157, %v1225, 0
    %1228 = vmatpush.msra.mxu0 0.0
    %1229 = vmatpush.msra.mxu0 0.0
    %1230 = vmatpush.msra.mxu0 0.0
    %1231 = vmatpush.msra.mxu0 0.0
    %1232 = vmatpush.msra.mxu0 0.0
    %1233 = vmatpush.msra.mxu0 0.0
    %1234 = vmatpush.msra.mxu0 0.0
    %1235 = vmatpush.msra.mxu0 0.0
    %1236 = vmatpush.msra.mxu0 0.0
    %1237 = vmatpush.msra.mxu0 0.0
    %1238 = vmatpush.msra.mxu0 0.0
    %1239 = vmatpush.msra.mxu0 0.0
    %1240 = vmatpush.msra.mxu0 %v778
    %1241 = vmatpush.msra.mxu0 %v777
    %1242 = vmatpush.msra.mxu0 %v776
    %1243 = vmatpush.msra.mxu0 %v775
    %1244 = vmatmul.f32.gmra.mxu0 %v1226
    %v1245 = vpop.f32.mrf.mxu0
    %v1246 = vadd.f32 0.0, %v1245
    %1247 = vdwg.mxu0
    %v1248 = vadd.f32 %v1222, %v1246
    %v1249 = vxor.u32 %v1248, 2147483648
    %v1250 = vmul.f32 %v1249, 1.442695
    %v1251 = vpow.pop %v1250
    %v1252 = vadd.f32 %v1251, 1.0
    %v1253 = vrcp.pop %v1252
    %v1254 = vmul.f32 %v1252, %v1253
    %v1255 = vsub.f32 1.0, %v1254
    %v1256 = vmul.f32 %v1253, %v1255
    %v1257 = vadd.f32 %v1253, %v1256
    %vm1258 = vweird.f32 %v1252
    %vm1259 = vweird.f32 %v1253
    %vm1260 = vmor %vm1258, %vm1259
    %v1261 = vsel %vm1260, %v1253, %v1257
    %v1262 = vand.u32 2147483647, %v1252
    %vm1263 = vcmp.eq.f32.partialorder %v1262, 8.507059e+37
    %v1264 = vand.u32 %v1252, 2147483648
    %v1265 = vor.u32 1.1754944e-38, %v1264
    %v1266 = vsel %vm1263, %v1265, %v1261
    %v1267 = vmul.f32 1.0, %v1266
    %v1268 = vtanh.pop %v1248
    %v1269 = vmul.f32 %v1267, %v1215
    %1271 = vrot.lane.b32.xlu0 %v1268, 32
    %v1272 = vpop.permute.xlu0 %1271
    %v1274 = vmul.f32 %v1267, %v1272
    %1276 = vrot.lane.b32.xlu0 %v1274, 32
    %v1277 = vpop.permute.xlu0 %1276
    %v1279 = vadd.f32 %v1269, %v1277
    %v1280 = vtanh.pop %v1279
    %1282 = vrot.lane.b32.xlu0 %v1280, 32
    %v1283 = vpop.permute.xlu0 %1282
    %v1285 = vmul.f32 %v1267, %v1283
    %v1286 = vld [vmem:[#allocation7] sm:$0xff]
    %v1287 = vld [vmem:[#allocation7 + $0x8] sm:$0xff]
    %v1288 = vld [vmem:[#allocation7 + $0x10] sm:$0xff]
    %v1289 = vld [vmem:[#allocation7 + $0x18] sm:$0xff]
    %v1290 = vld [vmem:[%s8] sm:$0x1]
    %v1292 = vperm.slane %v1290, 0
    %1295 = vrot.lane.b32.xlu0 %v1285, 64
    %v1296 = vpop.permute.xlu0 %1295
    %v1297 = vsel %vm157, %v1296, 0
    %1299 = vmatpush.msra.mxu0 0.0
    %1300 = vmatpush.msra.mxu0 0.0
    %1301 = vmatpush.msra.mxu0 0.0
    %1302 = vmatpush.msra.mxu0 0.0
    %1303 = vmatpush.msra.mxu0 0.0
    %1304 = vmatpush.msra.mxu0 0.0
    %1305 = vmatpush.msra.mxu0 0.0
    %1306 = vmatpush.msra.mxu0 0.0
    %1307 = vmatpush.msra.mxu0 0.0
    %1308 = vmatpush.msra.mxu0 0.0
    %1309 = vmatpush.msra.mxu0 0.0
    %1310 = vmatpush.msra.mxu0 0.0
    %1311 = vmatpush.msra.mxu0 %v1289
    %1312 = vmatpush.msra.mxu0 %v1288
    %1313 = vmatpush.msra.mxu0 %v1287
    %1314 = vmatpush.msra.mxu0 %v1286
    %1315 = vmatmul.f32.gmra.mxu0 %v1297
    %v1316 = vpop.f32.mrf.mxu0
    %v1317 = vadd.f32 %v1292, %v1316
    %1318 = vdwg.mxu0
    %1319 = vst [vmem:[#allocation9] sm:$0xff] %v1317
    // Predicated region
    $region46: #{tpu_custom_call.1} parent=1 // pred_check
      _
    $region47: #{tpu_custom_call.1} parent=1 // pred_check_branch
      %1321 = sbr.rel (0) target = $region49
    $region48: #{tpu_custom_call.1} parent=1 // pred_region
      %1323 = vsyncadd [#allocation6], 0
      %s1325 = sshll.u32 [#allocation9], 4
      %s1326 = int_to_ptr.vmem [resolvable:$true] %s1325
      %s1327 = sshll.u32 %s9, 4
      %s1328 = int_to_ptr.hbm [resolvable:$true] %s1327
      %1330 = dma.vmem_to_hbm [thread:$0]  %s1326, 128, %s1328, [#allocation6]
    $region49: #{tpu_custom_call.1} parent=1 // pred_fallthru
      _
    // Predicated region
    $region50: #{tpu_custom_call.1} parent=1 // pred_check
      _
    $region51: #{tpu_custom_call.1} parent=1 // pred_check_branch
      %1332 = sbr.rel (0) target = $region53
    $region52: #{tpu_custom_call.1} parent=1 // pred_region
      %1334 = dma.done [#allocation6], 128
    $region53: #{tpu_custom_call.1} parent=1 // pred_fallthru
      _
    %1335 = vsyncpa [#allocation5], 1
    %1336 = vsyncpa [#allocation8], 1
    %1337 = vsyncpa [#allocation6], 1

</llo_original>
